<compile_context>
chip_gen: v7x
topology: tpu7x:2x2x1
jax: 0.10.0
libtpu: 0.0.40
codegen_flags: <defaults>
</compile_context>

<pallas_src>
import jax
import jax.numpy as jnp
from jax.experimental import pallas as pl
from jax.experimental.pallas import tpu as pltpu

INPUT_SIZE = 3 * 32 * 32   # 3072 (already a multiple of 128)
HIDDEN1 = 100
HIDDEN2 = 100
HIDDEN3 = 100
OUTPUT_SIZE = 10

PAD = 128                  # padded hidden / output width (lane-dense)
TM_MAX = 256               # batch tile (rows) for large batches


def _mlp_kernel(x_ref,
                w1_ref, b1_ref,
                w2_ref, b2_ref,
                w3_ref, b3_ref,
                w4_ref, b4_ref,
                o_ref):
    # x tile is bf16 (tm, 3072); weights bf16 (in, out); biases f32 (1, out).
    x = x_ref[...]

    # l1 + sigmoid (MXU bf16 -> f32 accumulate, sigmoid in f32 on EUP)
    h = jnp.dot(x, w1_ref[...], preferred_element_type=jnp.float32) + b1_ref[...]
    h = jax.nn.sigmoid(h)

    # l2 + sigmoid
    h = jnp.dot(h.astype(jnp.bfloat16), w2_ref[...],
                preferred_element_type=jnp.float32) + b2_ref[...]
    h = jax.nn.sigmoid(h)

    # l3 + sigmoid
    h = jnp.dot(h.astype(jnp.bfloat16), w3_ref[...],
                preferred_element_type=jnp.float32) + b3_ref[...]
    h = jax.nn.sigmoid(h)

    # l4 (no activation)
    out = jnp.dot(h.astype(jnp.bfloat16), w4_ref[...],
                  preferred_element_type=jnp.float32) + b4_ref[...]
    o_ref[...] = out.astype(o_ref.dtype)


def prepare_params(params):
    """One-time prep: transpose to (in, out), zero-pad to 128-wide, cast bf16.

    Do NOT call per forward pass; the whole point is to keep the per-call
    wrapper free of weight transposes / pads.
    """
    (w1, b1), (w2, b2), (w3, b3), (w4, b4) = params

    def pad_wt(w, in_pad, out_pad):
        wt = w.T  # (in, out), torch nn.Linear stores (out, in)
        wt = jnp.pad(wt, ((0, in_pad - wt.shape[0]), (0, out_pad - wt.shape[1])))
        return wt.astype(jnp.bfloat16)

    def pad_b(b, out_pad):
        return jnp.pad(b, (0, out_pad - b.shape[0])).reshape(1, out_pad).astype(jnp.float32)

    return (
        pad_wt(w1, INPUT_SIZE, PAD), pad_b(b1, PAD),
        pad_wt(w2, PAD, PAD),        pad_b(b2, PAD),
        pad_wt(w3, PAD, PAD),        pad_b(b3, PAD),
        pad_wt(w4, PAD, PAD),        pad_b(b4, PAD),
    )


def neural_net_sigmoid_vanish(x, prepared):
    """Forward pass. x: (N, 3, 32, 32) float32 (NCHW, like the torch module).

    `prepared` must come from prepare_params().
    """
    n = x.shape[0]
    x_flat = x.reshape(n, -1)                       # == x.view(-1, 32*32*3)
    assert x_flat.shape[1] == INPUT_SIZE
    x_flat = x_flat.astype(jnp.bfloat16)            # halve the x DMA too

    # Pad batch to a sublane multiple and choose the row tile.
    n8 = ((n + 7) // 8) * 8
    tm = min(TM_MAX, n8)
    n_pad = ((n8 + tm - 1) // tm) * tm
    if n_pad != n:
        x_flat = jnp.pad(x_flat, ((0, n_pad - n), (0, 0)))

    grid = (n_pad // tm,)

    w1, b1, w2, b2, w3, b3, w4, b4 = prepared

    # x / out tile over the batch; weights & biases stay resident across steps.
    x_spec = pl.BlockSpec((tm, INPUT_SIZE), lambda i: (i, 0))
    o_spec = pl.BlockSpec((tm, PAD), lambda i: (i, 0))

    def wspec(shape):
        return pl.BlockSpec(shape, lambda i: (0, 0))

    in_specs = [
        x_spec,
        wspec((INPUT_SIZE, PAD)), wspec((1, PAD)),
        wspec((PAD, PAD)),        wspec((1, PAD)),
        wspec((PAD, PAD)),        wspec((1, PAD)),
        wspec((PAD, PAD)),        wspec((1, PAD)),
    ]

    weight_bytes = (INPUT_SIZE * PAD + 3 * PAD * PAD) * 2 + 4 * PAD * 4
    cost = pl.CostEstimate(
        flops=2 * n_pad * (INPUT_SIZE * PAD + 3 * PAD * PAD),
        transcendentals=3 * n_pad * PAD,
        bytes_accessed=n_pad * INPUT_SIZE * 2 + weight_bytes + n_pad * PAD * 4,
    )

    out = pl.pallas_call(
        _mlp_kernel,
        out_shape=jax.ShapeDtypeStruct((n_pad, PAD), jnp.float32),
        grid=grid,
        in_specs=in_specs,
        out_specs=o_spec,
        compiler_params=pltpu.CompilerParams(
            dimension_semantics=("parallel",)),
        cost_estimate=cost,
    )(x_flat, w1, b1, w2, b2, w3, b3, w4, b4)

    return out[:n, :OUTPUT_SIZE]


def init_params(key):
    """Deterministic init matching torch.nn.Linear default:
    U(-1/sqrt(fan_in), 1/sqrt(fan_in)) for weight (out, in) and bias."""
    dims = [(INPUT_SIZE, HIDDEN1), (HIDDEN1, HIDDEN2),
            (HIDDEN2, HIDDEN3), (HIDDEN3, OUTPUT_SIZE)]
    params = []
    keys = jax.random.split(key, 2 * len(dims))
    for i, (fan_in, fan_out) in enumerate(dims):
        bound = 1.0 / (fan_in ** 0.5)
        w = jax.random.uniform(keys[2 * i], (fan_out, fan_in),
                               minval=-bound, maxval=bound, dtype=jnp.float32)
        b = jax.random.uniform(keys[2 * i + 1], (fan_out,),
                               minval=-bound, maxval=bound, dtype=jnp.float32)
        params.append((w, b))
    return params


def reference_forward_f32(x, params):
    """Pure-JAX f32 reference of the torch forward (semantic check)."""
    h = x.reshape(x.shape[0], -1)
    (w1, b1), (w2, b2), (w3, b3), (w4, b4) = params
    h = jax.nn.sigmoid(h @ w1.T + b1)
    h = jax.nn.sigmoid(h @ w2.T + b2)
    h = jax.nn.sigmoid(h @ w3.T + b3)
    return h @ w4.T + b4


def reference_forward_prepared(x, prepared):
    """Pure-JAX reference with the SAME numerics as the kernel
    (bf16 MXU inputs, f32 accumulation) for a tight correctness check."""
    w1, b1, w2, b2, w3, b3, w4, b4 = prepared
    h = x.reshape(x.shape[0], -1).astype(jnp.bfloat16)
    h = jax.nn.sigmoid(jnp.dot(h, w1, preferred_element_type=jnp.float32) + b1)
    h = jax.nn.sigmoid(jnp.dot(h.astype(jnp.bfloat16), w2,
                               preferred_element_type=jnp.float32) + b2)
    h = jax.nn.sigmoid(jnp.dot(h.astype(jnp.bfloat16), w3,
                               preferred_element_type=jnp.float32) + b3)
    out = jnp.dot(h.astype(jnp.bfloat16), w4,
                  preferred_element_type=jnp.float32) + b4
    return out[:, :OUTPUT_SIZE]


if __name__ == "__main__":
    key = jax.random.PRNGKey(0)
    k_params, k_x = jax.random.split(key)

    params = init_params(k_params)
    prepared = prepare_params(params)          # one-time weight prep

    batch = 8
    x = jax.random.normal(k_x, (batch, 3, 32, 32), dtype=jnp.float32)

    out = neural_net_sigmoid_vanish(x, prepared)
    out = jax.block_until_ready(out)
    assert out.shape == (batch, OUTPUT_SIZE)

    # Tight check vs a reference using identical (bf16-input / f32-accum) numerics.
    ref_same = reference_forward_prepared(x, prepared)
    assert jnp.allclose(out, ref_same, atol=2e-3, rtol=2e-3), \
        "mismatch vs bf16-matched reference"

    # Loose semantic check vs the exact f32 torch-style forward (bf16 weights
    # introduce ~1e-2-level absolute differences).
    ref_f32 = reference_forward_f32(x, params)
    assert jnp.allclose(out, ref_f32, atol=1e-1, rtol=1e-1), \
        "mismatch vs f32 reference"

    print("KERNEL_OK")
</pallas_src>

<mosaic_0001>
module attributes {stable_mosaic.version = 11 : i64} {
  func.func @_mlp_kernel(%arg0: i32, %arg1: memref<8x3072xbf16, #tpu.memory_space<vmem>>, %arg2: memref<3072x128xbf16, #tpu.memory_space<vmem>>, %arg3: memref<1x128xf32, #tpu.memory_space<vmem>>, %arg4: memref<128x128xbf16, #tpu.memory_space<vmem>>, %arg5: memref<1x128xf32, #tpu.memory_space<vmem>>, %arg6: memref<128x128xbf16, #tpu.memory_space<vmem>>, %arg7: memref<1x128xf32, #tpu.memory_space<vmem>>, %arg8: memref<128x128xbf16, #tpu.memory_space<vmem>>, %arg9: memref<1x128xf32, #tpu.memory_space<vmem>>, %arg10: memref<8x128xf32, #tpu.memory_space<vmem>>) attributes {dimension_semantics = [#tpu.dimension_semantics<parallel>], iteration_bounds = array<i64: 1>, scalar_prefetch = 0 : i64, scratch_operands = 0 : i64, tpu.core_type = #tpu.core_type<tc>, window_params = [{transform_indices = @transform_0, window_bounds = array<i64: 8, 3072>}, {pipeline_mode = #tpu.pipeline_mode<synchronous>, transform_indices = @transform_1, window_bounds = array<i64: 3072, 128>}, {pipeline_mode = #tpu.pipeline_mode<synchronous>, transform_indices = @transform_2, window_bounds = array<i64: 1, 128>}, {pipeline_mode = #tpu.pipeline_mode<synchronous>, transform_indices = @transform_3, window_bounds = array<i64: 128, 128>}, {pipeline_mode = #tpu.pipeline_mode<synchronous>, transform_indices = @transform_4, window_bounds = array<i64: 1, 128>}, {pipeline_mode = #tpu.pipeline_mode<synchronous>, transform_indices = @transform_5, window_bounds = array<i64: 128, 128>}, {pipeline_mode = #tpu.pipeline_mode<synchronous>, transform_indices = @transform_6, window_bounds = array<i64: 1, 128>}, {pipeline_mode = #tpu.pipeline_mode<synchronous>, transform_indices = @transform_7, window_bounds = array<i64: 128, 128>}, {pipeline_mode = #tpu.pipeline_mode<synchronous>, transform_indices = @transform_8, window_bounds = array<i64: 1, 128>}, {transform_indices = @transform_9, window_bounds = array<i64: 8, 128>}]} {
    %c0 = arith.constant 0 : index
    %c0_0 = arith.constant 0 : index
    %0 = vector.load %arg1[%c0, %c0_0] : memref<8x3072xbf16, #tpu.memory_space<vmem>>, vector<8x3072xbf16>
    %c0_1 = arith.constant 0 : index
    %c0_2 = arith.constant 0 : index
    %1 = vector.load %arg2[%c0_1, %c0_2] : memref<3072x128xbf16, #tpu.memory_space<vmem>>, vector<3072x128xbf16>
    %cst = arith.constant dense<0.000000e+00> : vector<8x128xf32>
    %2 = tpu.matmul %0, %1, %cst {dimension_numbers = #tpu.dot_dimension_numbers<[1], [0], [0], [1], [0, 0, 1, 1], [], []>} : vector<8x3072xbf16>, vector<3072x128xbf16>, vector<8x128xf32> -> vector<8x128xf32>
    %c0_3 = arith.constant 0 : index
    %c0_4 = arith.constant 0 : index
    %3 = vector.load %arg3[%c0_3, %c0_4] : memref<1x128xf32, #tpu.memory_space<vmem>>, vector<1x128xf32>
    %4 = vector.broadcast %3 : vector<1x128xf32> to vector<8x128xf32>
    %5 = arith.addf %2, %4 : vector<8x128xf32>
    %6 = arith.negf %5 : vector<8x128xf32>
    %7 = math.exp %6 : vector<8x128xf32>
    %cst_5 = arith.constant 1.000000e+00 : f32
    %8 = vector.broadcast %cst_5 : f32 to vector<8x128xf32>
    %9 = arith.addf %8, %7 : vector<8x128xf32>
    %10 = arith.divf %8, %9 : vector<8x128xf32>
    %11 = arith.truncf %10 : vector<8x128xf32> to vector<8x128xbf16>
    %c0_6 = arith.constant 0 : index
    %c0_7 = arith.constant 0 : index
    %12 = vector.load %arg4[%c0_6, %c0_7] : memref<128x128xbf16, #tpu.memory_space<vmem>>, vector<128x128xbf16>
    %cst_8 = arith.constant dense<0.000000e+00> : vector<8x128xf32>
    %13 = tpu.matmul %11, %12, %cst_8 {dimension_numbers = #tpu.dot_dimension_numbers<[1], [0], [0], [1], [0, 0, 1, 1], [], []>} : vector<8x128xbf16>, vector<128x128xbf16>, vector<8x128xf32> -> vector<8x128xf32>
    %c0_9 = arith.constant 0 : index
    %c0_10 = arith.constant 0 : index
    %14 = vector.load %arg5[%c0_9, %c0_10] : memref<1x128xf32, #tpu.memory_space<vmem>>, vector<1x128xf32>
    %15 = vector.broadcast %14 : vector<1x128xf32> to vector<8x128xf32>
    %16 = arith.addf %13, %15 : vector<8x128xf32>
    %17 = arith.negf %16 : vector<8x128xf32>
    %18 = math.exp %17 : vector<8x128xf32>
    %cst_11 = arith.constant 1.000000e+00 : f32
    %19 = vector.broadcast %cst_11 : f32 to vector<8x128xf32>
    %20 = arith.addf %19, %18 : vector<8x128xf32>
    %21 = arith.divf %19, %20 : vector<8x128xf32>
    %22 = arith.truncf %21 : vector<8x128xf32> to vector<8x128xbf16>
    %c0_12 = arith.constant 0 : index
    %c0_13 = arith.constant 0 : index
    %23 = vector.load %arg6[%c0_12, %c0_13] : memref<128x128xbf16, #tpu.memory_space<vmem>>, vector<128x128xbf16>
    %cst_14 = arith.constant dense<0.000000e+00> : vector<8x128xf32>
    %24 = tpu.matmul %22, %23, %cst_14 {dimension_numbers = #tpu.dot_dimension_numbers<[1], [0], [0], [1], [0, 0, 1, 1], [], []>} : vector<8x128xbf16>, vector<128x128xbf16>, vector<8x128xf32> -> vector<8x128xf32>
    %c0_15 = arith.constant 0 : index
    %c0_16 = arith.constant 0 : index
    %25 = vector.load %arg7[%c0_15, %c0_16] : memref<1x128xf32, #tpu.memory_space<vmem>>, vector<1x128xf32>
    %26 = vector.broadcast %25 : vector<1x128xf32> to vector<8x128xf32>
    %27 = arith.addf %24, %26 : vector<8x128xf32>
    %28 = arith.negf %27 : vector<8x128xf32>
    %29 = math.exp %28 : vector<8x128xf32>
    %cst_17 = arith.constant 1.000000e+00 : f32
    %30 = vector.broadcast %cst_17 : f32 to vector<8x128xf32>
    %31 = arith.addf %30, %29 : vector<8x128xf32>
    %32 = arith.divf %30, %31 : vector<8x128xf32>
    %33 = arith.truncf %32 : vector<8x128xf32> to vector<8x128xbf16>
    %c0_18 = arith.constant 0 : index
    %c0_19 = arith.constant 0 : index
    %34 = vector.load %arg8[%c0_18, %c0_19] : memref<128x128xbf16, #tpu.memory_space<vmem>>, vector<128x128xbf16>
    %cst_20 = arith.constant dense<0.000000e+00> : vector<8x128xf32>
    %35 = tpu.matmul %33, %34, %cst_20 {dimension_numbers = #tpu.dot_dimension_numbers<[1], [0], [0], [1], [0, 0, 1, 1], [], []>} : vector<8x128xbf16>, vector<128x128xbf16>, vector<8x128xf32> -> vector<8x128xf32>
    %c0_21 = arith.constant 0 : index
    %c0_22 = arith.constant 0 : index
    %36 = vector.load %arg9[%c0_21, %c0_22] : memref<1x128xf32, #tpu.memory_space<vmem>>, vector<1x128xf32>
    %37 = vector.broadcast %36 : vector<1x128xf32> to vector<8x128xf32>
    %38 = arith.addf %35, %37 : vector<8x128xf32>
    %c0_23 = arith.constant 0 : index
    %c0_24 = arith.constant 0 : index
    %39 = vector.load %arg10[%c0_23, %c0_24] : memref<8x128xf32, #tpu.memory_space<vmem>>, vector<8x128xf32>
    tpu.vector_store %arg10[%c0_23, %c0_24], %38 {strides = array<i32>} : memref<8x128xf32, #tpu.memory_space<vmem>>, vector<8x128xf32>,
    return
  }
  func.func @transform_0(%arg0: i32) -> (i32, i32) {
    %c0_i32 = arith.constant 0 : i32
    %c0_i32_0 = arith.constant 0 : i32
    return %arg0, %c0_i32 : i32, i32
  }
  func.func @transform_1(%arg0: i32) -> (i32, i32) {
    %c0_i32 = arith.constant 0 : i32
    %c0_i32_0 = arith.constant 0 : i32
    %c0_i32_1 = arith.constant 0 : i32
    return %c0_i32, %c0_i32_0 : i32, i32
  }
  func.func @transform_2(%arg0: i32) -> (i32, i32) {
    %c0_i32 = arith.constant 0 : i32
    %c0_i32_0 = arith.constant 0 : i32
    %c0_i32_1 = arith.constant 0 : i32
    return %c0_i32, %c0_i32_0 : i32, i32
  }
  func.func @transform_3(%arg0: i32) -> (i32, i32) {
    %c0_i32 = arith.constant 0 : i32
    %c0_i32_0 = arith.constant 0 : i32
    %c0_i32_1 = arith.constant 0 : i32
    return %c0_i32, %c0_i32_0 : i32, i32
  }
  func.func @transform_4(%arg0: i32) -> (i32, i32) {
    %c0_i32 = arith.constant 0 : i32
    %c0_i32_0 = arith.constant 0 : i32
    %c0_i32_1 = arith.constant 0 : i32
    return %c0_i32, %c0_i32_0 : i32, i32
  }
  func.func @transform_5(%arg0: i32) -> (i32, i32) {
    %c0_i32 = arith.constant 0 : i32
    %c0_i32_0 = arith.constant 0 : i32
    %c0_i32_1 = arith.constant 0 : i32
    return %c0_i32, %c0_i32_0 : i32, i32
  }
  func.func @transform_6(%arg0: i32) -> (i32, i32) {
    %c0_i32 = arith.constant 0 : i32
    %c0_i32_0 = arith.constant 0 : i32
    %c0_i32_1 = arith.constant 0 : i32
    return %c0_i32, %c0_i32_0 : i32, i32
  }
  func.func @transform_7(%arg0: i32) -> (i32, i32) {
    %c0_i32 = arith.constant 0 : i32
    %c0_i32_0 = arith.constant 0 : i32
    %c0_i32_1 = arith.constant 0 : i32
    return %c0_i32, %c0_i32_0 : i32, i32
  }
  func.func @transform_8(%arg0: i32) -> (i32, i32) {
    %c0_i32 = arith.constant 0 : i32
    %c0_i32_0 = arith.constant 0 : i32
    %c0_i32_1 = arith.constant 0 : i32
    return %c0_i32, %c0_i32_0 : i32, i32
  }
  func.func @transform_9(%arg0: i32) -> (i32, i32) {
    %c0_i32 = arith.constant 0 : i32
    %c0_i32_0 = arith.constant 0 : i32
    return %arg0, %c0_i32 : i32, i32
  }
}

</mosaic_0001>

<llo_original>
// kernel: tpu_custom_call.1
$region0: #{tpu_custom_call.1}
  #allocation0 [shape = 'u32[]', space=smem, size = 0x4, offset = 0x4, fixed_abs, tag = 'smem constant byte address 0x4 - core index']
  #allocation1 [shape = 'u32[144,128]{1,0:T(1,128)}', space=vmem, size = 0x12000, scoped, tag = 'internal scratch']
  %s0 = inlined_call_operand.hbm [shape: bf16[8,3072], index: 0, kind: input, shape index: {}]
  %s1 = inlined_call_operand.hbm [shape: bf16[3072,128], index: 1, kind: input, shape index: {}]
  %s2 = inlined_call_operand.vmem [shape: f32[1,128], index: 2, kind: input, shape index: {}]
  %s3 = inlined_call_operand.hbm [shape: bf16[128,128], index: 3, kind: input, shape index: {}]
  %s4 = inlined_call_operand.vmem [shape: f32[1,128], index: 4, kind: input, shape index: {}]
  %s5 = inlined_call_operand.hbm [shape: bf16[128,128], index: 5, kind: input, shape index: {}]
  %s6 = inlined_call_operand.vmem [shape: f32[1,128], index: 6, kind: input, shape index: {}]
  %s7 = inlined_call_operand.hbm [shape: bf16[128,128], index: 7, kind: input, shape index: {}]
  %s8 = inlined_call_operand.vmem [shape: f32[1,128], index: 8, kind: input, shape index: {}]
  %s9 = inlined_call_operand.hbm [shape: f32[8,128], index: 9, kind: output, shape index: {}]
  %s10 = sld [smem:[#allocation0]]
  $region66: #{tpu_custom_call.1} parent=0
    _
  %s12 = ssub.s32 1, %s10
  %s13 = scalar_select 0, %s12, %s10
  $region1: #{tpu_custom_call.1} parent=0
    #allocation2 [shape = 'u8[49152]{0}', space=vmem, size = 0xc000, scoped, tag = 'input window, operand 0, single buffered']
    #allocation3 [shape = 's32[1]{0}', space=sflag, size = 0x4, scoped, tag = 'scoped memory for tpu_custom_call.1']
    #allocation4 [shape = 's32[1]{0}', space=sflag, size = 0x4, scoped, tag = 'scoped memory for tpu_custom_call.1']
    #allocation5 [shape = 'u8[786432]{0}', space=vmem, size = 0xc0000, scoped, tag = 'input window, operand 1, single buffered']
    #allocation6 [shape = 's32[1]{0}', space=sflag, size = 0x4, scoped, tag = 'scoped memory for tpu_custom_call.1']
    #allocation7 [shape = 'u8[32768]{0}', space=vmem, size = 0x8000, scoped, tag = 'input window, operand 3, single buffered']
    #allocation8 [shape = 'u8[32768]{0}', space=vmem, size = 0x8000, scoped, tag = 'input window, operand 5, single buffered']
    #allocation9 [shape = 's32[1]{0}', space=sflag, size = 0x4, scoped, tag = 'scoped memory for tpu_custom_call.1']
    #allocation10 [shape = 'u8[32768]{0}', space=vmem, size = 0x8000, scoped, tag = 'input window, operand 7, single buffered']
    #allocation11 [shape = 'u8[4096]{0}', space=vmem, size = 0x1000, scoped, tag = 'output window, operand 0, single buffered']
    %14 = vsyncpa [#allocation3], 0
    %15 = vsyncpa [#allocation6], 0
    %16 = vsyncpa [#allocation9], 0
    %17 = vsyncpa [#allocation4], 0
    // Predicated region
    $region2: #{tpu_custom_call.1} parent=1 // pred_check
      _
    $region3: #{tpu_custom_call.1} parent=1 // pred_check_branch
      %19 = sbr.rel (0) target = $region5
    $region4: #{tpu_custom_call.1} parent=1 // pred_region
      %s21 = ssub.s32 1536, 1536
      %22 = vsyncadd [#allocation3], %s21
      %s24 = sshll.u32 [#allocation2], 4
      %s25 = int_to_ptr.vmem [resolvable:$true] %s24
      %27 = dma.hbm_to_vmem [thread:$0]  %s0, 1536, %s25, [#allocation3]
    $region5: #{tpu_custom_call.1} parent=1 // pred_fallthru
      _
    // Predicated region
    $region6: #{tpu_custom_call.1} parent=1 // pred_check
      _
    $region7: #{tpu_custom_call.1} parent=1 // pred_check_branch
      %29 = sbr.rel (0) target = $region9
    $region8: #{tpu_custom_call.1} parent=1 // pred_region
      %s31 = ssub.s32 24576, 24576
      %32 = vsyncadd [#allocation6], %s31
      %s33 = sshll.u32 [#allocation5], 4
      %s34 = int_to_ptr.vmem [resolvable:$true] %s33
      %39 = dma.hbm_to_vmem [thread:$0]  %s1, 24576, %s34, [#allocation6], 64, 64, 4
    $region9: #{tpu_custom_call.1} parent=1 // pred_fallthru
      _
    // Predicated region
    $region10: #{tpu_custom_call.1} parent=1 // pred_check
      _
    $region11: #{tpu_custom_call.1} parent=1 // pred_check_branch
      %41 = sbr.rel (0) target = $region13
    $region12: #{tpu_custom_call.1} parent=1 // pred_region
      _
    $region13: #{tpu_custom_call.1} parent=1 // pred_fallthru
      _
    // Predicated region
    $region14: #{tpu_custom_call.1} parent=1 // pred_check
      _
    $region15: #{tpu_custom_call.1} parent=1 // pred_check_branch
      %43 = sbr.rel (0) target = $region17
    $region16: #{tpu_custom_call.1} parent=1 // pred_region
      %s45 = ssub.s32 1024, 1024
      %46 = vsyncadd [#allocation6], %s45
      %s47 = sshll.u32 [#allocation7], 4
      %s48 = int_to_ptr.vmem [resolvable:$true] %s47
      %53 = dma.hbm_to_vmem [thread:$0]  %s3, 1024, %s48, [#allocation6], 64, 64, 4
    $region17: #{tpu_custom_call.1} parent=1 // pred_fallthru
      _
    // Predicated region
    $region18: #{tpu_custom_call.1} parent=1 // pred_check
      _
    $region19: #{tpu_custom_call.1} parent=1 // pred_check_branch
      %55 = sbr.rel (0) target = $region21
    $region20: #{tpu_custom_call.1} parent=1 // pred_region
      _
    $region21: #{tpu_custom_call.1} parent=1 // pred_fallthru
      _
    // Predicated region
    $region22: #{tpu_custom_call.1} parent=1 // pred_check
      _
    $region23: #{tpu_custom_call.1} parent=1 // pred_check_branch
      %57 = sbr.rel (0) target = $region25
    $region24: #{tpu_custom_call.1} parent=1 // pred_region
      %s59 = ssub.s32 1024, 1024
      %60 = vsyncadd [#allocation9], %s59
      %s61 = sshll.u32 [#allocation8], 4
      %s62 = int_to_ptr.vmem [resolvable:$true] %s61
      %67 = dma.hbm_to_vmem [thread:$0]  %s5, 1024, %s62, [#allocation9], 64, 64, 4
    $region25: #{tpu_custom_call.1} parent=1 // pred_fallthru
      _
    // Predicated region
    $region26: #{tpu_custom_call.1} parent=1 // pred_check
      _
    $region27: #{tpu_custom_call.1} parent=1 // pred_check_branch
      %69 = sbr.rel (0) target = $region29
    $region28: #{tpu_custom_call.1} parent=1 // pred_region
      _
    $region29: #{tpu_custom_call.1} parent=1 // pred_fallthru
      _
    // Predicated region
    $region30: #{tpu_custom_call.1} parent=1 // pred_check
      _
    $region31: #{tpu_custom_call.1} parent=1 // pred_check_branch
      %71 = sbr.rel (0) target = $region33
    $region32: #{tpu_custom_call.1} parent=1 // pred_region
      %s73 = ssub.s32 1024, 1024
      %74 = vsyncadd [#allocation9], %s73
      %s75 = sshll.u32 [#allocation10], 4
      %s76 = int_to_ptr.vmem [resolvable:$true] %s75
      %81 = dma.hbm_to_vmem [thread:$0]  %s7, 1024, %s76, [#allocation9], 64, 64, 4
    $region33: #{tpu_custom_call.1} parent=1 // pred_fallthru
      _
    // Predicated region
    $region34: #{tpu_custom_call.1} parent=1 // pred_check
      _
    $region35: #{tpu_custom_call.1} parent=1 // pred_check_branch
      %83 = sbr.rel (0) target = $region37
    $region36: #{tpu_custom_call.1} parent=1 // pred_region
      _
    $region37: #{tpu_custom_call.1} parent=1 // pred_fallthru
      _
    // Predicated region
    $region38: #{tpu_custom_call.1} parent=1 // pred_check
      _
    $region39: #{tpu_custom_call.1} parent=1 // pred_check_branch
      %85 = sbr.rel (0) target = $region41
    $region40: #{tpu_custom_call.1} parent=1 // pred_region
      %86 = dma.done [#allocation3], 1536
    $region41: #{tpu_custom_call.1} parent=1 // pred_fallthru
      _
    // Predicated region
    $region42: #{tpu_custom_call.1} parent=1 // pred_check
      _
    $region43: #{tpu_custom_call.1} parent=1 // pred_check_branch
      %88 = sbr.rel (0) target = $region45
    $region44: #{tpu_custom_call.1} parent=1 // pred_region
      %89 = dma.done [#allocation6], 24576
    $region45: #{tpu_custom_call.1} parent=1 // pred_fallthru
      _
    // Predicated region
    $region46: #{tpu_custom_call.1} parent=1 // pred_check
      _
    $region47: #{tpu_custom_call.1} parent=1 // pred_check_branch
      %91 = sbr.rel (0) target = $region49
    $region48: #{tpu_custom_call.1} parent=1 // pred_region
      %92 = dma.done [#allocation6], 1024
    $region49: #{tpu_custom_call.1} parent=1 // pred_fallthru
      _
    // Predicated region
    $region50: #{tpu_custom_call.1} parent=1 // pred_check
      _
    $region51: #{tpu_custom_call.1} parent=1 // pred_check_branch
      %94 = sbr.rel (0) target = $region53
    $region52: #{tpu_custom_call.1} parent=1 // pred_region
      %95 = dma.done [#allocation9], 1024
    $region53: #{tpu_custom_call.1} parent=1 // pred_fallthru
      _
    // Predicated region
    $region54: #{tpu_custom_call.1} parent=1 // pred_check
      _
    $region55: #{tpu_custom_call.1} parent=1 // pred_check_branch
      %97 = sbr.rel (0) target = $region57
    $region56: #{tpu_custom_call.1} parent=1 // pred_region
      %98 = dma.done [#allocation9], 1024
    $region57: #{tpu_custom_call.1} parent=1 // pred_fallthru
      _
    %v100 = vld [vmem:[#allocation2] sm:$0xff]
    %v101 = vld [vmem:[#allocation2 + $0x8] sm:$0xff]
    %v102 = vld [vmem:[#allocation2 + $0x10] sm:$0xff]
    %v103 = vld [vmem:[#allocation2 + $0x18] sm:$0xff]
    %v104 = vld [vmem:[#allocation2 + $0x20] sm:$0xff]
    %v105 = vld [vmem:[#allocation2 + $0x28] sm:$0xff]
    %v106 = vld [vmem:[#allocation2 + $0x30] sm:$0xff]
    %v107 = vld [vmem:[#allocation2 + $0x38] sm:$0xff]
    %v108 = vld [vmem:[#allocation2 + $0x40] sm:$0xff]
    %v109 = vld [vmem:[#allocation2 + $0x48] sm:$0xff]
    %v110 = vld [vmem:[#allocation2 + $0x50] sm:$0xff]
    %v111 = vld [vmem:[#allocation2 + $0x58] sm:$0xff]
    %v112 = vld [vmem:[#allocation5] sm:$0xf]
    %v113 = vld [vmem:[#allocation5 + $0x4] sm:$0xf]
    %v114 = vld [vmem:[#allocation5 + $0x8] sm:$0xf]
    %v115 = vld [vmem:[#allocation5 + $0xc] sm:$0xf]
    %v116 = vld [vmem:[#allocation5 + $0x10] sm:$0xf]
    %v117 = vld [vmem:[#allocation5 + $0x14] sm:$0xf]
    %v118 = vld [vmem:[#allocation5 + $0x18] sm:$0xf]
    %v119 = vld [vmem:[#allocation5 + $0x1c] sm:$0xf]
    %v120 = vld [vmem:[#allocation5 + $0x20] sm:$0xf]
    %v121 = vld [vmem:[#allocation5 + $0x24] sm:$0xf]
    %v122 = vld [vmem:[#allocation5 + $0x28] sm:$0xf]
    %v123 = vld [vmem:[#allocation5 + $0x2c] sm:$0xf]
    %v124 = vld [vmem:[#allocation5 + $0x30] sm:$0xf]
    %v125 = vld [vmem:[#allocation5 + $0x34] sm:$0xf]
    %v126 = vld [vmem:[#allocation5 + $0x38] sm:$0xf]
    %v127 = vld [vmem:[#allocation5 + $0x3c] sm:$0xf]
    %v128 = vld [vmem:[#allocation5 + $0x40] sm:$0xf]
    %v129 = vld [vmem:[#allocation5 + $0x44] sm:$0xf]
    %v130 = vld [vmem:[#allocation5 + $0x48] sm:$0xf]
    %v131 = vld [vmem:[#allocation5 + $0x4c] sm:$0xf]
    %v132 = vld [vmem:[#allocation5 + $0x50] sm:$0xf]
    %v133 = vld [vmem:[#allocation5 + $0x54] sm:$0xf]
    %v134 = vld [vmem:[#allocation5 + $0x58] sm:$0xf]
    %v135 = vld [vmem:[#allocation5 + $0x5c] sm:$0xf]
    %v136 = vld [vmem:[#allocation5 + $0x60] sm:$0xf]
    %v137 = vld [vmem:[#allocation5 + $0x64] sm:$0xf]
    %v138 = vld [vmem:[#allocation5 + $0x68] sm:$0xf]
    %v139 = vld [vmem:[#allocation5 + $0x6c] sm:$0xf]
    %v140 = vld [vmem:[#allocation5 + $0x70] sm:$0xf]
    %v141 = vld [vmem:[#allocation5 + $0x74] sm:$0xf]
    %v142 = vld [vmem:[#allocation5 + $0x78] sm:$0xf]
    %v143 = vld [vmem:[#allocation5 + $0x7c] sm:$0xf]
    %v144 = vld [vmem:[#allocation5 + $0x80] sm:$0xf]
    %v145 = vld [vmem:[#allocation5 + $0x84] sm:$0xf]
    %v146 = vld [vmem:[#allocation5 + $0x88] sm:$0xf]
    %v147 = vld [vmem:[#allocation5 + $0x8c] sm:$0xf]
    %v148 = vld [vmem:[#allocation5 + $0x90] sm:$0xf]
    %v149 = vld [vmem:[#allocation5 + $0x94] sm:$0xf]
    %v150 = vld [vmem:[#allocation5 + $0x98] sm:$0xf]
    %v151 = vld [vmem:[#allocation5 + $0x9c] sm:$0xf]
    %v152 = vld [vmem:[#allocation5 + $0xa0] sm:$0xf]
    %v153 = vld [vmem:[#allocation5 + $0xa4] sm:$0xf]
    %v154 = vld [vmem:[#allocation5 + $0xa8] sm:$0xf]
    %v155 = vld [vmem:[#allocation5 + $0xac] sm:$0xf]
    %v156 = vld [vmem:[#allocation5 + $0xb0] sm:$0xf]
    %v157 = vld [vmem:[#allocation5 + $0xb4] sm:$0xf]
    %v158 = vld [vmem:[#allocation5 + $0xb8] sm:$0xf]
    %v159 = vld [vmem:[#allocation5 + $0xbc] sm:$0xf]
    %v160 = vld [vmem:[#allocation5 + $0xc0] sm:$0xf]
    %v161 = vld [vmem:[#allocation5 + $0xc4] sm:$0xf]
    %v162 = vld [vmem:[#allocation5 + $0xc8] sm:$0xf]
    %v163 = vld [vmem:[#allocation5 + $0xcc] sm:$0xf]
    %v164 = vld [vmem:[#allocation5 + $0xd0] sm:$0xf]
    %v165 = vld [vmem:[#allocation5 + $0xd4] sm:$0xf]
    %v166 = vld [vmem:[#allocation5 + $0xd8] sm:$0xf]
    %v167 = vld [vmem:[#allocation5 + $0xdc] sm:$0xf]
    %v168 = vld [vmem:[#allocation5 + $0xe0] sm:$0xf]
    %v169 = vld [vmem:[#allocation5 + $0xe4] sm:$0xf]
    %v170 = vld [vmem:[#allocation5 + $0xe8] sm:$0xf]
    %v171 = vld [vmem:[#allocation5 + $0xec] sm:$0xf]
    %v172 = vld [vmem:[#allocation5 + $0xf0] sm:$0xf]
    %v173 = vld [vmem:[#allocation5 + $0xf4] sm:$0xf]
    %v174 = vld [vmem:[#allocation5 + $0xf8] sm:$0xf]
    %v175 = vld [vmem:[#allocation5 + $0xfc] sm:$0xf]
    %v176 = vld [vmem:[#allocation5 + $0x100] sm:$0xf]
    %v177 = vld [vmem:[#allocation5 + $0x104] sm:$0xf]
    %v178 = vld [vmem:[#allocation5 + $0x108] sm:$0xf]
    %v179 = vld [vmem:[#allocation5 + $0x10c] sm:$0xf]
    %v180 = vld [vmem:[#allocation5 + $0x110] sm:$0xf]
    %v181 = vld [vmem:[#allocation5 + $0x114] sm:$0xf]
    %v182 = vld [vmem:[#allocation5 + $0x118] sm:$0xf]
    %v183 = vld [vmem:[#allocation5 + $0x11c] sm:$0xf]
    %v184 = vld [vmem:[#allocation5 + $0x120] sm:$0xf]
    %v185 = vld [vmem:[#allocation5 + $0x124] sm:$0xf]
    %v186 = vld [vmem:[#allocation5 + $0x128] sm:$0xf]
    %v187 = vld [vmem:[#allocation5 + $0x12c] sm:$0xf]
    %v188 = vld [vmem:[#allocation5 + $0x130] sm:$0xf]
    %v189 = vld [vmem:[#allocation5 + $0x134] sm:$0xf]
    %v190 = vld [vmem:[#allocation5 + $0x138] sm:$0xf]
    %v191 = vld [vmem:[#allocation5 + $0x13c] sm:$0xf]
    %v192 = vld [vmem:[#allocation5 + $0x140] sm:$0xf]
    %v193 = vld [vmem:[#allocation5 + $0x144] sm:$0xf]
    %v194 = vld [vmem:[#allocation5 + $0x148] sm:$0xf]
    %v195 = vld [vmem:[#allocation5 + $0x14c] sm:$0xf]
    %v196 = vld [vmem:[#allocation5 + $0x150] sm:$0xf]
    %v197 = vld [vmem:[#allocation5 + $0x154] sm:$0xf]
    %v198 = vld [vmem:[#allocation5 + $0x158] sm:$0xf]
    %v199 = vld [vmem:[#allocation5 + $0x15c] sm:$0xf]
    %v200 = vld [vmem:[#allocation5 + $0x160] sm:$0xf]
    %v201 = vld [vmem:[#allocation5 + $0x164] sm:$0xf]
    %v202 = vld [vmem:[#allocation5 + $0x168] sm:$0xf]
    %v203 = vld [vmem:[#allocation5 + $0x16c] sm:$0xf]
    %v204 = vld [vmem:[#allocation5 + $0x170] sm:$0xf]
    %v205 = vld [vmem:[#allocation5 + $0x174] sm:$0xf]
    %v206 = vld [vmem:[#allocation5 + $0x178] sm:$0xf]
    %v207 = vld [vmem:[#allocation5 + $0x17c] sm:$0xf]
    %v208 = vld [vmem:[#allocation5 + $0x180] sm:$0xf]
    %v209 = vld [vmem:[#allocation5 + $0x184] sm:$0xf]
    %v210 = vld [vmem:[#allocation5 + $0x188] sm:$0xf]
    %v211 = vld [vmem:[#allocation5 + $0x18c] sm:$0xf]
    %v212 = vld [vmem:[#allocation5 + $0x190] sm:$0xf]
    %v213 = vld [vmem:[#allocation5 + $0x194] sm:$0xf]
    %v214 = vld [vmem:[#allocation5 + $0x198] sm:$0xf]
    %v215 = vld [vmem:[#allocation5 + $0x19c] sm:$0xf]
    %v216 = vld [vmem:[#allocation5 + $0x1a0] sm:$0xf]
    %v217 = vld [vmem:[#allocation5 + $0x1a4] sm:$0xf]
    %v218 = vld [vmem:[#allocation5 + $0x1a8] sm:$0xf]
    %v219 = vld [vmem:[#allocation5 + $0x1ac] sm:$0xf]
    %v220 = vld [vmem:[#allocation5 + $0x1b0] sm:$0xf]
    %v221 = vld [vmem:[#allocation5 + $0x1b4] sm:$0xf]
    %v222 = vld [vmem:[#allocation5 + $0x1b8] sm:$0xf]
    %v223 = vld [vmem:[#allocation5 + $0x1bc] sm:$0xf]
    %v224 = vld [vmem:[#allocation5 + $0x1c0] sm:$0xf]
    %v225 = vld [vmem:[#allocation5 + $0x1c4] sm:$0xf]
    %v226 = vld [vmem:[#allocation5 + $0x1c8] sm:$0xf]
    %v227 = vld [vmem:[#allocation5 + $0x1cc] sm:$0xf]
    %v228 = vld [vmem:[#allocation5 + $0x1d0] sm:$0xf]
    %v229 = vld [vmem:[#allocation5 + $0x1d4] sm:$0xf]
    %v230 = vld [vmem:[#allocation5 + $0x1d8] sm:$0xf]
    %v231 = vld [vmem:[#allocation5 + $0x1dc] sm:$0xf]
    %v232 = vld [vmem:[#allocation5 + $0x1e0] sm:$0xf]
    %v233 = vld [vmem:[#allocation5 + $0x1e4] sm:$0xf]
    %v234 = vld [vmem:[#allocation5 + $0x1e8] sm:$0xf]
    %v235 = vld [vmem:[#allocation5 + $0x1ec] sm:$0xf]
    %v236 = vld [vmem:[#allocation5 + $0x1f0] sm:$0xf]
    %v237 = vld [vmem:[#allocation5 + $0x1f4] sm:$0xf]
    %v238 = vld [vmem:[#allocation5 + $0x1f8] sm:$0xf]
    %v239 = vld [vmem:[#allocation5 + $0x1fc] sm:$0xf]
    %v240 = vld [vmem:[#allocation5 + $0x200] sm:$0xf]
    %v241 = vld [vmem:[#allocation5 + $0x204] sm:$0xf]
    %v242 = vld [vmem:[#allocation5 + $0x208] sm:$0xf]
    %v243 = vld [vmem:[#allocation5 + $0x20c] sm:$0xf]
    %v244 = vld [vmem:[#allocation5 + $0x210] sm:$0xf]
    %v245 = vld [vmem:[#allocation5 + $0x214] sm:$0xf]
    %v246 = vld [vmem:[#allocation5 + $0x218] sm:$0xf]
    %v247 = vld [vmem:[#allocation5 + $0x21c] sm:$0xf]
    %v248 = vld [vmem:[#allocation5 + $0x220] sm:$0xf]
    %v249 = vld [vmem:[#allocation5 + $0x224] sm:$0xf]
    %v250 = vld [vmem:[#allocation5 + $0x228] sm:$0xf]
    %v251 = vld [vmem:[#allocation5 + $0x22c] sm:$0xf]
    %v252 = vld [vmem:[#allocation5 + $0x230] sm:$0xf]
    %v253 = vld [vmem:[#allocation5 + $0x234] sm:$0xf]
    %v254 = vld [vmem:[#allocation5 + $0x238] sm:$0xf]
    %v255 = vld [vmem:[#allocation5 + $0x23c] sm:$0xf]
    %v256 = vld [vmem:[#allocation5 + $0x240] sm:$0xf]
    %v257 = vld [vmem:[#allocation5 + $0x244] sm:$0xf]
    %v258 = vld [vmem:[#allocation5 + $0x248] sm:$0xf]
    %v259 = vld [vmem:[#allocation5 + $0x24c] sm:$0xf]
    %v260 = vld [vmem:[#allocation5 + $0x250] sm:$0xf]
    %v261 = vld [vmem:[#allocation5 + $0x254] sm:$0xf]
    %v262 = vld [vmem:[#allocation5 + $0x258] sm:$0xf]
    %v263 = vld [vmem:[#allocation5 + $0x25c] sm:$0xf]
    %v264 = vld [vmem:[#allocation5 + $0x260] sm:$0xf]
    %v265 = vld [vmem:[#allocation5 + $0x264] sm:$0xf]
    %v266 = vld [vmem:[#allocation5 + $0x268] sm:$0xf]
    %v267 = vld [vmem:[#allocation5 + $0x26c] sm:$0xf]
    %v268 = vld [vmem:[#allocation5 + $0x270] sm:$0xf]
    %v269 = vld [vmem:[#allocation5 + $0x274] sm:$0xf]
    %v270 = vld [vmem:[#allocation5 + $0x278] sm:$0xf]
    %v271 = vld [vmem:[#allocation5 + $0x27c] sm:$0xf]
    %v272 = vld [vmem:[#allocation5 + $0x280] sm:$0xf]
    %v273 = vld [vmem:[#allocation5 + $0x284] sm:$0xf]
    %v274 = vld [vmem:[#allocation5 + $0x288] sm:$0xf]
    %v275 = vld [vmem:[#allocation5 + $0x28c] sm:$0xf]
    %v276 = vld [vmem:[#allocation5 + $0x290] sm:$0xf]
    %v277 = vld [vmem:[#allocation5 + $0x294] sm:$0xf]
    %v278 = vld [vmem:[#allocation5 + $0x298] sm:$0xf]
    %v279 = vld [vmem:[#allocation5 + $0x29c] sm:$0xf]
    %v280 = vld [vmem:[#allocation5 + $0x2a0] sm:$0xf]
    %v281 = vld [vmem:[#allocation5 + $0x2a4] sm:$0xf]
    %v282 = vld [vmem:[#allocation5 + $0x2a8] sm:$0xf]
    %v283 = vld [vmem:[#allocation5 + $0x2ac] sm:$0xf]
    %v284 = vld [vmem:[#allocation5 + $0x2b0] sm:$0xf]
    %v285 = vld [vmem:[#allocation5 + $0x2b4] sm:$0xf]
    %v286 = vld [vmem:[#allocation5 + $0x2b8] sm:$0xf]
    %v287 = vld [vmem:[#allocation5 + $0x2bc] sm:$0xf]
    %v288 = vld [vmem:[#allocation5 + $0x2c0] sm:$0xf]
    %v289 = vld [vmem:[#allocation5 + $0x2c4] sm:$0xf]
    %v290 = vld [vmem:[#allocation5 + $0x2c8] sm:$0xf]
    %v291 = vld [vmem:[#allocation5 + $0x2cc] sm:$0xf]
    %v292 = vld [vmem:[#allocation5 + $0x2d0] sm:$0xf]
    %v293 = vld [vmem:[#allocation5 + $0x2d4] sm:$0xf]
    %v294 = vld [vmem:[#allocation5 + $0x2d8] sm:$0xf]
    %v295 = vld [vmem:[#allocation5 + $0x2dc] sm:$0xf]
    %v296 = vld [vmem:[#allocation5 + $0x2e0] sm:$0xf]
    %v297 = vld [vmem:[#allocation5 + $0x2e4] sm:$0xf]
    %v298 = vld [vmem:[#allocation5 + $0x2e8] sm:$0xf]
    %v299 = vld [vmem:[#allocation5 + $0x2ec] sm:$0xf]
    %v300 = vld [vmem:[#allocation5 + $0x2f0] sm:$0xf]
    %v301 = vld [vmem:[#allocation5 + $0x2f4] sm:$0xf]
    %v302 = vld [vmem:[#allocation5 + $0x2f8] sm:$0xf]
    %v303 = vld [vmem:[#allocation5 + $0x2fc] sm:$0xf]
    %v304 = vld [vmem:[#allocation5 + $0x300] sm:$0xf]
    %v305 = vld [vmem:[#allocation5 + $0x304] sm:$0xf]
    %v306 = vld [vmem:[#allocation5 + $0x308] sm:$0xf]
    %v307 = vld [vmem:[#allocation5 + $0x30c] sm:$0xf]
    %v308 = vld [vmem:[#allocation5 + $0x310] sm:$0xf]
    %v309 = vld [vmem:[#allocation5 + $0x314] sm:$0xf]
    %v310 = vld [vmem:[#allocation5 + $0x318] sm:$0xf]
    %v311 = vld [vmem:[#allocation5 + $0x31c] sm:$0xf]
    %v312 = vld [vmem:[#allocation5 + $0x320] sm:$0xf]
    %v313 = vld [vmem:[#allocation5 + $0x324] sm:$0xf]
    %v314 = vld [vmem:[#allocation5 + $0x328] sm:$0xf]
    %v315 = vld [vmem:[#allocation5 + $0x32c] sm:$0xf]
    %v316 = vld [vmem:[#allocation5 + $0x330] sm:$0xf]
    %v317 = vld [vmem:[#allocation5 + $0x334] sm:$0xf]
    %v318 = vld [vmem:[#allocation5 + $0x338] sm:$0xf]
    %v319 = vld [vmem:[#allocation5 + $0x33c] sm:$0xf]
    %v320 = vld [vmem:[#allocation5 + $0x340] sm:$0xf]
    %v321 = vld [vmem:[#allocation5 + $0x344] sm:$0xf]
    %v322 = vld [vmem:[#allocation5 + $0x348] sm:$0xf]
    %v323 = vld [vmem:[#allocation5 + $0x34c] sm:$0xf]
    %v324 = vld [vmem:[#allocation5 + $0x350] sm:$0xf]
    %v325 = vld [vmem:[#allocation5 + $0x354] sm:$0xf]
    %v326 = vld [vmem:[#allocation5 + $0x358] sm:$0xf]
    %v327 = vld [vmem:[#allocation5 + $0x35c] sm:$0xf]
    %v328 = vld [vmem:[#allocation5 + $0x360] sm:$0xf]
    %v329 = vld [vmem:[#allocation5 + $0x364] sm:$0xf]
    %v330 = vld [vmem:[#allocation5 + $0x368] sm:$0xf]
    %v331 = vld [vmem:[#allocation5 + $0x36c] sm:$0xf]
    %v332 = vld [vmem:[#allocation5 + $0x370] sm:$0xf]
    %v333 = vld [vmem:[#allocation5 + $0x374] sm:$0xf]
    %v334 = vld [vmem:[#allocation5 + $0x378] sm:$0xf]
    %v335 = vld [vmem:[#allocation5 + $0x37c] sm:$0xf]
    %v336 = vld [vmem:[#allocation5 + $0x380] sm:$0xf]
    %v337 = vld [vmem:[#allocation5 + $0x384] sm:$0xf]
    %v338 = vld [vmem:[#allocation5 + $0x388] sm:$0xf]
    %v339 = vld [vmem:[#allocation5 + $0x38c] sm:$0xf]
    %v340 = vld [vmem:[#allocation5 + $0x390] sm:$0xf]
    %v341 = vld [vmem:[#allocation5 + $0x394] sm:$0xf]
    %v342 = vld [vmem:[#allocation5 + $0x398] sm:$0xf]
    %v343 = vld [vmem:[#allocation5 + $0x39c] sm:$0xf]
    %v344 = vld [vmem:[#allocation5 + $0x3a0] sm:$0xf]
    %v345 = vld [vmem:[#allocation5 + $0x3a4] sm:$0xf]
    %v346 = vld [vmem:[#allocation5 + $0x3a8] sm:$0xf]
    %v347 = vld [vmem:[#allocation5 + $0x3ac] sm:$0xf]
    %v348 = vld [vmem:[#allocation5 + $0x3b0] sm:$0xf]
    %v349 = vld [vmem:[#allocation5 + $0x3b4] sm:$0xf]
    %v350 = vld [vmem:[#allocation5 + $0x3b8] sm:$0xf]
    %v351 = vld [vmem:[#allocation5 + $0x3bc] sm:$0xf]
    %v352 = vld [vmem:[#allocation5 + $0x3c0] sm:$0xf]
    %v353 = vld [vmem:[#allocation5 + $0x3c4] sm:$0xf]
    %v354 = vld [vmem:[#allocation5 + $0x3c8] sm:$0xf]
    %v355 = vld [vmem:[#allocation5 + $0x3cc] sm:$0xf]
    %v356 = vld [vmem:[#allocation5 + $0x3d0] sm:$0xf]
    %v357 = vld [vmem:[#allocation5 + $0x3d4] sm:$0xf]
    %v358 = vld [vmem:[#allocation5 + $0x3d8] sm:$0xf]
    %v359 = vld [vmem:[#allocation5 + $0x3dc] sm:$0xf]
    %v360 = vld [vmem:[#allocation5 + $0x3e0] sm:$0xf]
    %v361 = vld [vmem:[#allocation5 + $0x3e4] sm:$0xf]
    %v362 = vld [vmem:[#allocation5 + $0x3e8] sm:$0xf]
    %v363 = vld [vmem:[#allocation5 + $0x3ec] sm:$0xf]
    %v364 = vld [vmem:[#allocation5 + $0x3f0] sm:$0xf]
    %v365 = vld [vmem:[#allocation5 + $0x3f4] sm:$0xf]
    %v366 = vld [vmem:[#allocation5 + $0x3f8] sm:$0xf]
    %v367 = vld [vmem:[#allocation5 + $0x3fc] sm:$0xf]
    %v368 = vld [vmem:[#allocation5 + $0x400] sm:$0xf]
    %v369 = vld [vmem:[#allocation5 + $0x404] sm:$0xf]
    %v370 = vld [vmem:[#allocation5 + $0x408] sm:$0xf]
    %v371 = vld [vmem:[#allocation5 + $0x40c] sm:$0xf]
    %v372 = vld [vmem:[#allocation5 + $0x410] sm:$0xf]
    %v373 = vld [vmem:[#allocation5 + $0x414] sm:$0xf]
    %v374 = vld [vmem:[#allocation5 + $0x418] sm:$0xf]
    %v375 = vld [vmem:[#allocation5 + $0x41c] sm:$0xf]
    %v376 = vld [vmem:[#allocation5 + $0x420] sm:$0xf]
    %v377 = vld [vmem:[#allocation5 + $0x424] sm:$0xf]
    %v378 = vld [vmem:[#allocation5 + $0x428] sm:$0xf]
    %v379 = vld [vmem:[#allocation5 + $0x42c] sm:$0xf]
    %v380 = vld [vmem:[#allocation5 + $0x430] sm:$0xf]
    %v381 = vld [vmem:[#allocation5 + $0x434] sm:$0xf]
    %v382 = vld [vmem:[#allocation5 + $0x438] sm:$0xf]
    %v383 = vld [vmem:[#allocation5 + $0x43c] sm:$0xf]
    %v384 = vld [vmem:[#allocation5 + $0x440] sm:$0xf]
    %v385 = vld [vmem:[#allocation5 + $0x444] sm:$0xf]
    %v386 = vld [vmem:[#allocation5 + $0x448] sm:$0xf]
    %v387 = vld [vmem:[#allocation5 + $0x44c] sm:$0xf]
    %v388 = vld [vmem:[#allocation5 + $0x450] sm:$0xf]
    %v389 = vld [vmem:[#allocation5 + $0x454] sm:$0xf]
    %v390 = vld [vmem:[#allocation5 + $0x458] sm:$0xf]
    %v391 = vld [vmem:[#allocation5 + $0x45c] sm:$0xf]
    %v392 = vld [vmem:[#allocation5 + $0x460] sm:$0xf]
    %v393 = vld [vmem:[#allocation5 + $0x464] sm:$0xf]
    %v394 = vld [vmem:[#allocation5 + $0x468] sm:$0xf]
    %v395 = vld [vmem:[#allocation5 + $0x46c] sm:$0xf]
    %v396 = vld [vmem:[#allocation5 + $0x470] sm:$0xf]
    %v397 = vld [vmem:[#allocation5 + $0x474] sm:$0xf]
    %v398 = vld [vmem:[#allocation5 + $0x478] sm:$0xf]
    %v399 = vld [vmem:[#allocation5 + $0x47c] sm:$0xf]
    %v400 = vld [vmem:[#allocation5 + $0x480] sm:$0xf]
    %v401 = vld [vmem:[#allocation5 + $0x484] sm:$0xf]
    %v402 = vld [vmem:[#allocation5 + $0x488] sm:$0xf]
    %v403 = vld [vmem:[#allocation5 + $0x48c] sm:$0xf]
    %v404 = vld [vmem:[#allocation5 + $0x490] sm:$0xf]
    %v405 = vld [vmem:[#allocation5 + $0x494] sm:$0xf]
    %v406 = vld [vmem:[#allocation5 + $0x498] sm:$0xf]
    %v407 = vld [vmem:[#allocation5 + $0x49c] sm:$0xf]
    %v408 = vld [vmem:[#allocation5 + $0x4a0] sm:$0xf]
    %v409 = vld [vmem:[#allocation5 + $0x4a4] sm:$0xf]
    %v410 = vld [vmem:[#allocation5 + $0x4a8] sm:$0xf]
    %v411 = vld [vmem:[#allocation5 + $0x4ac] sm:$0xf]
    %v412 = vld [vmem:[#allocation5 + $0x4b0] sm:$0xf]
    %v413 = vld [vmem:[#allocation5 + $0x4b4] sm:$0xf]
    %v414 = vld [vmem:[#allocation5 + $0x4b8] sm:$0xf]
    %v415 = vld [vmem:[#allocation5 + $0x4bc] sm:$0xf]
    %v416 = vld [vmem:[#allocation5 + $0x4c0] sm:$0xf]
    %v417 = vld [vmem:[#allocation5 + $0x4c4] sm:$0xf]
    %v418 = vld [vmem:[#allocation5 + $0x4c8] sm:$0xf]
    %v419 = vld [vmem:[#allocation5 + $0x4cc] sm:$0xf]
    %v420 = vld [vmem:[#allocation5 + $0x4d0] sm:$0xf]
    %v421 = vld [vmem:[#allocation5 + $0x4d4] sm:$0xf]
    %v422 = vld [vmem:[#allocation5 + $0x4d8] sm:$0xf]
    %v423 = vld [vmem:[#allocation5 + $0x4dc] sm:$0xf]
    %v424 = vld [vmem:[#allocation5 + $0x4e0] sm:$0xf]
    %v425 = vld [vmem:[#allocation5 + $0x4e4] sm:$0xf]
    %v426 = vld [vmem:[#allocation5 + $0x4e8] sm:$0xf]
    %v427 = vld [vmem:[#allocation5 + $0x4ec] sm:$0xf]
    %v428 = vld [vmem:[#allocation5 + $0x4f0] sm:$0xf]
    %v429 = vld [vmem:[#allocation5 + $0x4f4] sm:$0xf]
    %v430 = vld [vmem:[#allocation5 + $0x4f8] sm:$0xf]
    %v431 = vld [vmem:[#allocation5 + $0x4fc] sm:$0xf]
    %v432 = vld [vmem:[#allocation5 + $0x500] sm:$0xf]
    %v433 = vld [vmem:[#allocation5 + $0x504] sm:$0xf]
    %v434 = vld [vmem:[#allocation5 + $0x508] sm:$0xf]
    %v435 = vld [vmem:[#allocation5 + $0x50c] sm:$0xf]
    %v436 = vld [vmem:[#allocation5 + $0x510] sm:$0xf]
    %v437 = vld [vmem:[#allocation5 + $0x514] sm:$0xf]
    %v438 = vld [vmem:[#allocation5 + $0x518] sm:$0xf]
    %v439 = vld [vmem:[#allocation5 + $0x51c] sm:$0xf]
    %v440 = vld [vmem:[#allocation5 + $0x520] sm:$0xf]
    %v441 = vld [vmem:[#allocation5 + $0x524] sm:$0xf]
    %v442 = vld [vmem:[#allocation5 + $0x528] sm:$0xf]
    %v443 = vld [vmem:[#allocation5 + $0x52c] sm:$0xf]
    %v444 = vld [vmem:[#allocation5 + $0x530] sm:$0xf]
    %v445 = vld [vmem:[#allocation5 + $0x534] sm:$0xf]
    %v446 = vld [vmem:[#allocation5 + $0x538] sm:$0xf]
    %v447 = vld [vmem:[#allocation5 + $0x53c] sm:$0xf]
    %v448 = vld [vmem:[#allocation5 + $0x540] sm:$0xf]
    %v449 = vld [vmem:[#allocation5 + $0x544] sm:$0xf]
    %v450 = vld [vmem:[#allocation5 + $0x548] sm:$0xf]
    %v451 = vld [vmem:[#allocation5 + $0x54c] sm:$0xf]
    %v452 = vld [vmem:[#allocation5 + $0x550] sm:$0xf]
    %v453 = vld [vmem:[#allocation5 + $0x554] sm:$0xf]
    %v454 = vld [vmem:[#allocation5 + $0x558] sm:$0xf]
    %v455 = vld [vmem:[#allocation5 + $0x55c] sm:$0xf]
    %v456 = vld [vmem:[#allocation5 + $0x560] sm:$0xf]
    %v457 = vld [vmem:[#allocation5 + $0x564] sm:$0xf]
    %v458 = vld [vmem:[#allocation5 + $0x568] sm:$0xf]
    %v459 = vld [vmem:[#allocation5 + $0x56c] sm:$0xf]
    %v460 = vld [vmem:[#allocation5 + $0x570] sm:$0xf]
    %v461 = vld [vmem:[#allocation5 + $0x574] sm:$0xf]
    %v462 = vld [vmem:[#allocation5 + $0x578] sm:$0xf]
    %v463 = vld [vmem:[#allocation5 + $0x57c] sm:$0xf]
    %v464 = vld [vmem:[#allocation5 + $0x580] sm:$0xf]
    %v465 = vld [vmem:[#allocation5 + $0x584] sm:$0xf]
    %v466 = vld [vmem:[#allocation5 + $0x588] sm:$0xf]
    %v467 = vld [vmem:[#allocation5 + $0x58c] sm:$0xf]
    %v468 = vld [vmem:[#allocation5 + $0x590] sm:$0xf]
    %v469 = vld [vmem:[#allocation5 + $0x594] sm:$0xf]
    %v470 = vld [vmem:[#allocation5 + $0x598] sm:$0xf]
    %v471 = vld [vmem:[#allocation5 + $0x59c] sm:$0xf]
    %v472 = vld [vmem:[#allocation5 + $0x5a0] sm:$0xf]
    %v473 = vld [vmem:[#allocation5 + $0x5a4] sm:$0xf]
    %v474 = vld [vmem:[#allocation5 + $0x5a8] sm:$0xf]
    %v475 = vld [vmem:[#allocation5 + $0x5ac] sm:$0xf]
    %v476 = vld [vmem:[#allocation5 + $0x5b0] sm:$0xf]
    %v477 = vld [vmem:[#allocation5 + $0x5b4] sm:$0xf]
    %v478 = vld [vmem:[#allocation5 + $0x5b8] sm:$0xf]
    %v479 = vld [vmem:[#allocation5 + $0x5bc] sm:$0xf]
    %v480 = vld [vmem:[#allocation5 + $0x5c0] sm:$0xf]
    %v481 = vld [vmem:[#allocation5 + $0x5c4] sm:$0xf]
    %v482 = vld [vmem:[#allocation5 + $0x5c8] sm:$0xf]
    %v483 = vld [vmem:[#allocation5 + $0x5cc] sm:$0xf]
    %v484 = vld [vmem:[#allocation5 + $0x5d0] sm:$0xf]
    %v485 = vld [vmem:[#allocation5 + $0x5d4] sm:$0xf]
    %v486 = vld [vmem:[#allocation5 + $0x5d8] sm:$0xf]
    %v487 = vld [vmem:[#allocation5 + $0x5dc] sm:$0xf]
    %v488 = vld [vmem:[#allocation5 + $0x5e0] sm:$0xf]
    %v489 = vld [vmem:[#allocation5 + $0x5e4] sm:$0xf]
    %v490 = vld [vmem:[#allocation5 + $0x5e8] sm:$0xf]
    %v491 = vld [vmem:[#allocation5 + $0x5ec] sm:$0xf]
    %v492 = vld [vmem:[#allocation5 + $0x5f0] sm:$0xf]
    %v493 = vld [vmem:[#allocation5 + $0x5f4] sm:$0xf]
    %v494 = vld [vmem:[#allocation5 + $0x5f8] sm:$0xf]
    %v495 = vld [vmem:[#allocation5 + $0x5fc] sm:$0xf]
    %v496 = vld [vmem:[%s2] sm:$0x1]
    %v498 = vlaneseq
    %v499 = vshrl.u32 %v498, 7
    %v500 = vsub.s32 0, %v499
    %v501 = vrot.slane %v496, %v500
    %v515 = vunpack.c.l.b16 %v100
    %v516 = vunpack.c.h.b16 %v100
    %v517 = vunpack.c.l.b16 %v101
    %v518 = vunpack.c.h.b16 %v101
    %v519 = vunpack.c.l.b16 %v102
    %v520 = vunpack.c.h.b16 %v102
    %v521 = vunpack.c.l.b16 %v103
    %v522 = vunpack.c.h.b16 %v103
    %v523 = vunpack.c.l.b16 %v104
    %v524 = vunpack.c.h.b16 %v104
    %v525 = vunpack.c.l.b16 %v105
    %v526 = vunpack.c.h.b16 %v105
    %v527 = vunpack.c.l.b16 %v106
    %v528 = vunpack.c.h.b16 %v106
    %v529 = vunpack.c.l.b16 %v107
    %v530 = vunpack.c.h.b16 %v107
    %v531 = vunpack.c.l.b16 %v108
    %v532 = vunpack.c.h.b16 %v108
    %v533 = vunpack.c.l.b16 %v109
    %v534 = vunpack.c.h.b16 %v109
    %v535 = vunpack.c.l.b16 %v110
    %v536 = vunpack.c.h.b16 %v110
    %v537 = vunpack.c.l.b16 %v111
    %v538 = vunpack.c.h.b16 %v111
    %v539 = vpack.c.b16 %v515, %v515
    %v540 = vpack.c.b16 %v516, %v516
    %v541 = vpack.c.b16 %v517, %v517
    %v542 = vpack.c.b16 %v518, %v518
    %v543 = vpack.c.b16 %v519, %v519
    %v544 = vpack.c.b16 %v520, %v520
    %v545 = vpack.c.b16 %v521, %v521
    %v546 = vpack.c.b16 %v522, %v522
    %v547 = vpack.c.b16 %v523, %v523
    %v548 = vpack.c.b16 %v524, %v524
    %v549 = vpack.c.b16 %v525, %v525
    %v550 = vpack.c.b16 %v526, %v526
    %v551 = vpack.c.b16 %v527, %v527
    %v552 = vpack.c.b16 %v528, %v528
    %v553 = vpack.c.b16 %v529, %v529
    %v554 = vpack.c.b16 %v530, %v530
    %v555 = vpack.c.b16 %v531, %v531
    %v556 = vpack.c.b16 %v532, %v532
    %v557 = vpack.c.b16 %v533, %v533
    %v558 = vpack.c.b16 %v534, %v534
    %v559 = vpack.c.b16 %v535, %v535
    %v560 = vpack.c.b16 %v536, %v536
    %v561 = vpack.c.b16 %v537, %v537
    %v562 = vpack.c.b16 %v538, %v538
    %v971 = vunpack.c.l.b16 %v112
    %v972 = vunpack.c.l.b16 %v113
    %v973 = vunpack.c.l.b16 %v114
    %v974 = vunpack.c.l.b16 %v115
    %v975 = vunpack.c.l.b16 %v116
    %v976 = vunpack.c.l.b16 %v117
    %v977 = vunpack.c.l.b16 %v118
    %v978 = vunpack.c.l.b16 %v119
    %v979 = vunpack.c.l.b16 %v120
    %v980 = vunpack.c.l.b16 %v121
    %v981 = vunpack.c.l.b16 %v122
    %v982 = vunpack.c.l.b16 %v123
    %v983 = vunpack.c.l.b16 %v124
    %v984 = vunpack.c.l.b16 %v125
    %v985 = vunpack.c.l.b16 %v126
    %v986 = vunpack.c.l.b16 %v127
    %v987 = vunpack.c.l.b16 %v128
    %v988 = vunpack.c.l.b16 %v129
    %v989 = vunpack.c.l.b16 %v130
    %v990 = vunpack.c.l.b16 %v131
    %v991 = vunpack.c.l.b16 %v132
    %v992 = vunpack.c.l.b16 %v133
    %v993 = vunpack.c.l.b16 %v134
    %v994 = vunpack.c.l.b16 %v135
    %v995 = vunpack.c.l.b16 %v136
    %v996 = vunpack.c.l.b16 %v137
    %v997 = vunpack.c.l.b16 %v138
    %v998 = vunpack.c.l.b16 %v139
    %v999 = vunpack.c.l.b16 %v140
    %v1000 = vunpack.c.l.b16 %v141
    %v1001 = vunpack.c.l.b16 %v142
    %v1002 = vunpack.c.l.b16 %v143
    %v1003 = vunpack.c.l.b16 %v144
    %v1004 = vunpack.c.l.b16 %v145
    %v1005 = vunpack.c.l.b16 %v146
    %v1006 = vunpack.c.l.b16 %v147
    %v1007 = vunpack.c.l.b16 %v148
    %v1008 = vunpack.c.l.b16 %v149
    %v1009 = vunpack.c.l.b16 %v150
    %v1010 = vunpack.c.l.b16 %v151
    %v1011 = vunpack.c.l.b16 %v152
    %v1012 = vunpack.c.l.b16 %v153
    %v1013 = vunpack.c.l.b16 %v154
    %v1014 = vunpack.c.l.b16 %v155
    %v1015 = vunpack.c.l.b16 %v156
    %v1016 = vunpack.c.l.b16 %v157
    %v1017 = vunpack.c.l.b16 %v158
    %v1018 = vunpack.c.l.b16 %v159
    %v1019 = vunpack.c.l.b16 %v160
    %v1020 = vunpack.c.l.b16 %v161
    %v1021 = vunpack.c.l.b16 %v162
    %v1022 = vunpack.c.l.b16 %v163
    %v1023 = vunpack.c.l.b16 %v164
    %v1024 = vunpack.c.l.b16 %v165
    %v1025 = vunpack.c.l.b16 %v166
    %v1026 = vunpack.c.l.b16 %v167
    %v1027 = vunpack.c.l.b16 %v168
    %v1028 = vunpack.c.l.b16 %v169
    %v1029 = vunpack.c.l.b16 %v170
    %v1030 = vunpack.c.l.b16 %v171
    %v1031 = vunpack.c.l.b16 %v172
    %v1032 = vunpack.c.l.b16 %v173
    %v1033 = vunpack.c.l.b16 %v174
    %v1034 = vunpack.c.l.b16 %v175
    %v1035 = vunpack.c.l.b16 %v176
    %v1036 = vunpack.c.l.b16 %v177
    %v1037 = vunpack.c.l.b16 %v178
    %v1038 = vunpack.c.l.b16 %v179
    %v1039 = vunpack.c.l.b16 %v180
    %v1040 = vunpack.c.l.b16 %v181
    %v1041 = vunpack.c.l.b16 %v182
    %v1042 = vunpack.c.l.b16 %v183
    %v1043 = vunpack.c.l.b16 %v184
    %v1044 = vunpack.c.l.b16 %v185
    %v1045 = vunpack.c.l.b16 %v186
    %v1046 = vunpack.c.l.b16 %v187
    %v1047 = vunpack.c.l.b16 %v188
    %v1048 = vunpack.c.l.b16 %v189
    %v1049 = vunpack.c.l.b16 %v190
    %v1050 = vunpack.c.l.b16 %v191
    %v1051 = vunpack.c.l.b16 %v192
    %v1052 = vunpack.c.l.b16 %v193
    %v1053 = vunpack.c.l.b16 %v194
    %v1054 = vunpack.c.l.b16 %v195
    %v1055 = vunpack.c.l.b16 %v196
    %v1056 = vunpack.c.l.b16 %v197
    %v1057 = vunpack.c.l.b16 %v198
    %v1058 = vunpack.c.l.b16 %v199
    %v1059 = vunpack.c.l.b16 %v200
    %v1060 = vunpack.c.l.b16 %v201
    %v1061 = vunpack.c.l.b16 %v202
    %v1062 = vunpack.c.l.b16 %v203
    %v1063 = vunpack.c.l.b16 %v204
    %v1064 = vunpack.c.l.b16 %v205
    %v1065 = vunpack.c.l.b16 %v206
    %v1066 = vunpack.c.l.b16 %v207
    %v1067 = vunpack.c.l.b16 %v208
    %v1068 = vunpack.c.l.b16 %v209
    %v1069 = vunpack.c.l.b16 %v210
    %v1070 = vunpack.c.l.b16 %v211
    %v1071 = vunpack.c.l.b16 %v212
    %v1072 = vunpack.c.l.b16 %v213
    %v1073 = vunpack.c.l.b16 %v214
    %v1074 = vunpack.c.l.b16 %v215
    %v1075 = vunpack.c.l.b16 %v216
    %v1076 = vunpack.c.l.b16 %v217
    %v1077 = vunpack.c.l.b16 %v218
    %v1078 = vunpack.c.l.b16 %v219
    %v1079 = vunpack.c.l.b16 %v220
    %v1080 = vunpack.c.l.b16 %v221
    %v1081 = vunpack.c.l.b16 %v222
    %v1082 = vunpack.c.l.b16 %v223
    %v1083 = vunpack.c.l.b16 %v224
    %v1084 = vunpack.c.l.b16 %v225
    %v1085 = vunpack.c.l.b16 %v226
    %v1086 = vunpack.c.l.b16 %v227
    %v1087 = vunpack.c.l.b16 %v228
    %v1088 = vunpack.c.l.b16 %v229
    %v1089 = vunpack.c.l.b16 %v230
    %v1090 = vunpack.c.l.b16 %v231
    %v1091 = vunpack.c.l.b16 %v232
    %v1092 = vunpack.c.l.b16 %v233
    %v1093 = vunpack.c.l.b16 %v234
    %v1094 = vunpack.c.l.b16 %v235
    %v1095 = vunpack.c.l.b16 %v236
    %v1096 = vunpack.c.l.b16 %v237
    %v1097 = vunpack.c.l.b16 %v238
    %v1098 = vunpack.c.l.b16 %v239
    %v1099 = vunpack.c.l.b16 %v240
    %v1100 = vunpack.c.l.b16 %v241
    %v1101 = vunpack.c.l.b16 %v242
    %v1102 = vunpack.c.l.b16 %v243
    %v1103 = vunpack.c.l.b16 %v244
    %v1104 = vunpack.c.l.b16 %v245
    %v1105 = vunpack.c.l.b16 %v246
    %v1106 = vunpack.c.l.b16 %v247
    %v1107 = vunpack.c.l.b16 %v248
    %v1108 = vunpack.c.l.b16 %v249
    %v1109 = vunpack.c.l.b16 %v250
    %v1110 = vunpack.c.l.b16 %v251
    %v1111 = vunpack.c.l.b16 %v252
    %v1112 = vunpack.c.l.b16 %v253
    %v1113 = vunpack.c.l.b16 %v254
    %v1114 = vunpack.c.l.b16 %v255
    %v1115 = vunpack.c.l.b16 %v256
    %v1116 = vunpack.c.l.b16 %v257
    %v1117 = vunpack.c.l.b16 %v258
    %v1118 = vunpack.c.l.b16 %v259
    %v1119 = vunpack.c.l.b16 %v260
    %v1120 = vunpack.c.l.b16 %v261
    %v1121 = vunpack.c.l.b16 %v262
    %v1122 = vunpack.c.l.b16 %v263
    %v1123 = vunpack.c.l.b16 %v264
    %v1124 = vunpack.c.l.b16 %v265
    %v1125 = vunpack.c.l.b16 %v266
    %v1126 = vunpack.c.l.b16 %v267
    %v1127 = vunpack.c.l.b16 %v268
    %v1128 = vunpack.c.l.b16 %v269
    %v1129 = vunpack.c.l.b16 %v270
    %v1130 = vunpack.c.l.b16 %v271
    %v1131 = vunpack.c.l.b16 %v272
    %v1132 = vunpack.c.l.b16 %v273
    %v1133 = vunpack.c.l.b16 %v274
    %v1134 = vunpack.c.l.b16 %v275
    %v1135 = vunpack.c.l.b16 %v276
    %v1136 = vunpack.c.l.b16 %v277
    %v1137 = vunpack.c.l.b16 %v278
    %v1138 = vunpack.c.l.b16 %v279
    %v1139 = vunpack.c.l.b16 %v280
    %v1140 = vunpack.c.l.b16 %v281
    %v1141 = vunpack.c.l.b16 %v282
    %v1142 = vunpack.c.l.b16 %v283
    %v1143 = vunpack.c.l.b16 %v284
    %v1144 = vunpack.c.l.b16 %v285
    %v1145 = vunpack.c.l.b16 %v286
    %v1146 = vunpack.c.l.b16 %v287
    %v1147 = vunpack.c.l.b16 %v288
    %v1148 = vunpack.c.l.b16 %v289
    %v1149 = vunpack.c.l.b16 %v290
    %v1150 = vunpack.c.l.b16 %v291
    %v1151 = vunpack.c.l.b16 %v292
    %v1152 = vunpack.c.l.b16 %v293
    %v1153 = vunpack.c.l.b16 %v294
    %v1154 = vunpack.c.l.b16 %v295
    %v1155 = vunpack.c.l.b16 %v296
    %v1156 = vunpack.c.l.b16 %v297
    %v1157 = vunpack.c.l.b16 %v298
    %v1158 = vunpack.c.l.b16 %v299
    %v1159 = vunpack.c.l.b16 %v300
    %v1160 = vunpack.c.l.b16 %v301
    %v1161 = vunpack.c.l.b16 %v302
    %v1162 = vunpack.c.l.b16 %v303
    %v1163 = vunpack.c.l.b16 %v304
    %v1164 = vunpack.c.l.b16 %v305
    %v1165 = vunpack.c.l.b16 %v306
    %v1166 = vunpack.c.l.b16 %v307
    %v1167 = vunpack.c.l.b16 %v308
    %v1168 = vunpack.c.l.b16 %v309
    %v1169 = vunpack.c.l.b16 %v310
    %v1170 = vunpack.c.l.b16 %v311
    %v1171 = vunpack.c.l.b16 %v312
    %v1172 = vunpack.c.l.b16 %v313
    %v1173 = vunpack.c.l.b16 %v314
    %v1174 = vunpack.c.l.b16 %v315
    %v1175 = vunpack.c.l.b16 %v316
    %v1176 = vunpack.c.l.b16 %v317
    %v1177 = vunpack.c.l.b16 %v318
    %v1178 = vunpack.c.l.b16 %v319
    %v1179 = vunpack.c.l.b16 %v320
    %v1180 = vunpack.c.l.b16 %v321
    %v1181 = vunpack.c.l.b16 %v322
    %v1182 = vunpack.c.l.b16 %v323
    %v1183 = vunpack.c.l.b16 %v324
    %v1184 = vunpack.c.l.b16 %v325
    %v1185 = vunpack.c.l.b16 %v326
    %v1186 = vunpack.c.l.b16 %v327
    %v1187 = vunpack.c.l.b16 %v328
    %v1188 = vunpack.c.l.b16 %v329
    %v1189 = vunpack.c.l.b16 %v330
    %v1190 = vunpack.c.l.b16 %v331
    %v1191 = vunpack.c.l.b16 %v332
    %v1192 = vunpack.c.l.b16 %v333
    %v1193 = vunpack.c.l.b16 %v334
    %v1194 = vunpack.c.l.b16 %v335
    %v1195 = vunpack.c.l.b16 %v336
    %v1196 = vunpack.c.l.b16 %v337
    %v1197 = vunpack.c.l.b16 %v338
    %v1198 = vunpack.c.l.b16 %v339
    %v1199 = vunpack.c.l.b16 %v340
    %v1200 = vunpack.c.l.b16 %v341
    %v1201 = vunpack.c.l.b16 %v342
    %v1202 = vunpack.c.l.b16 %v343
    %v1203 = vunpack.c.l.b16 %v344
    %v1204 = vunpack.c.l.b16 %v345
    %v1205 = vunpack.c.l.b16 %v346
    %v1206 = vunpack.c.l.b16 %v347
    %v1207 = vunpack.c.l.b16 %v348
    %v1208 = vunpack.c.l.b16 %v349
    %v1209 = vunpack.c.l.b16 %v350
    %v1210 = vunpack.c.l.b16 %v351
    %v1211 = vunpack.c.l.b16 %v352
    %v1212 = vunpack.c.l.b16 %v353
    %v1213 = vunpack.c.l.b16 %v354
    %v1214 = vunpack.c.l.b16 %v355
    %v1215 = vunpack.c.l.b16 %v356
    %v1216 = vunpack.c.l.b16 %v357
    %v1217 = vunpack.c.l.b16 %v358
    %v1218 = vunpack.c.l.b16 %v359
    %v1219 = vunpack.c.l.b16 %v360
    %v1220 = vunpack.c.l.b16 %v361
    %v1221 = vunpack.c.l.b16 %v362
    %v1222 = vunpack.c.l.b16 %v363
    %v1223 = vunpack.c.l.b16 %v364
    %v1224 = vunpack.c.l.b16 %v365
    %v1225 = vunpack.c.l.b16 %v366
    %v1226 = vunpack.c.l.b16 %v367
    %v1227 = vunpack.c.l.b16 %v368
    %v1228 = vunpack.c.l.b16 %v369
    %v1229 = vunpack.c.l.b16 %v370
    %v1230 = vunpack.c.l.b16 %v371
    %v1231 = vunpack.c.l.b16 %v372
    %v1232 = vunpack.c.l.b16 %v373
    %v1233 = vunpack.c.l.b16 %v374
    %v1234 = vunpack.c.l.b16 %v375
    %v1235 = vunpack.c.l.b16 %v376
    %v1236 = vunpack.c.l.b16 %v377
    %v1237 = vunpack.c.l.b16 %v378
    %v1238 = vunpack.c.l.b16 %v379
    %v1239 = vunpack.c.l.b16 %v380
    %v1240 = vunpack.c.l.b16 %v381
    %v1241 = vunpack.c.l.b16 %v382
    %v1242 = vunpack.c.l.b16 %v383
    %v1243 = vunpack.c.l.b16 %v384
    %v1244 = vunpack.c.l.b16 %v385
    %v1245 = vunpack.c.l.b16 %v386
    %v1246 = vunpack.c.l.b16 %v387
    %v1247 = vunpack.c.l.b16 %v388
    %v1248 = vunpack.c.l.b16 %v389
    %v1249 = vunpack.c.l.b16 %v390
    %v1250 = vunpack.c.l.b16 %v391
    %v1251 = vunpack.c.l.b16 %v392
    %v1252 = vunpack.c.l.b16 %v393
    %v1253 = vunpack.c.l.b16 %v394
    %v1254 = vunpack.c.l.b16 %v395
    %v1255 = vunpack.c.l.b16 %v396
    %v1256 = vunpack.c.l.b16 %v397
    %v1257 = vunpack.c.l.b16 %v398
    %v1258 = vunpack.c.l.b16 %v399
    %v1259 = vunpack.c.l.b16 %v400
    %v1260 = vunpack.c.l.b16 %v401
    %v1261 = vunpack.c.l.b16 %v402
    %v1262 = vunpack.c.l.b16 %v403
    %v1263 = vunpack.c.l.b16 %v404
    %v1264 = vunpack.c.l.b16 %v405
    %v1265 = vunpack.c.l.b16 %v406
    %v1266 = vunpack.c.l.b16 %v407
    %v1267 = vunpack.c.l.b16 %v408
    %v1268 = vunpack.c.l.b16 %v409
    %v1269 = vunpack.c.l.b16 %v410
    %v1270 = vunpack.c.l.b16 %v411
    %v1271 = vunpack.c.l.b16 %v412
    %v1272 = vunpack.c.l.b16 %v413
    %v1273 = vunpack.c.l.b16 %v414
    %v1274 = vunpack.c.l.b16 %v415
    %v1275 = vunpack.c.l.b16 %v416
    %v1276 = vunpack.c.l.b16 %v417
    %v1277 = vunpack.c.l.b16 %v418
    %v1278 = vunpack.c.l.b16 %v419
    %v1279 = vunpack.c.l.b16 %v420
    %v1280 = vunpack.c.l.b16 %v421
    %v1281 = vunpack.c.l.b16 %v422
    %v1282 = vunpack.c.l.b16 %v423
    %v1283 = vunpack.c.l.b16 %v424
    %v1284 = vunpack.c.l.b16 %v425
    %v1285 = vunpack.c.l.b16 %v426
    %v1286 = vunpack.c.l.b16 %v427
    %v1287 = vunpack.c.l.b16 %v428
    %v1288 = vunpack.c.l.b16 %v429
    %v1289 = vunpack.c.l.b16 %v430
    %v1290 = vunpack.c.l.b16 %v431
    %v1291 = vunpack.c.l.b16 %v432
    %v1292 = vunpack.c.l.b16 %v433
    %v1293 = vunpack.c.l.b16 %v434
    %v1294 = vunpack.c.l.b16 %v435
    %v1295 = vunpack.c.l.b16 %v436
    %v1296 = vunpack.c.l.b16 %v437
    %v1297 = vunpack.c.l.b16 %v438
    %v1298 = vunpack.c.l.b16 %v439
    %v1299 = vunpack.c.l.b16 %v440
    %v1300 = vunpack.c.l.b16 %v441
    %v1301 = vunpack.c.l.b16 %v442
    %v1302 = vunpack.c.l.b16 %v443
    %v1303 = vunpack.c.l.b16 %v444
    %v1304 = vunpack.c.l.b16 %v445
    %v1305 = vunpack.c.l.b16 %v446
    %v1306 = vunpack.c.l.b16 %v447
    %v1307 = vunpack.c.l.b16 %v448
    %v1308 = vunpack.c.l.b16 %v449
    %v1309 = vunpack.c.l.b16 %v450
    %v1310 = vunpack.c.l.b16 %v451
    %v1311 = vunpack.c.l.b16 %v452
    %v1312 = vunpack.c.l.b16 %v453
    %v1313 = vunpack.c.l.b16 %v454
    %v1314 = vunpack.c.l.b16 %v455
    %v1315 = vunpack.c.l.b16 %v456
    %v1316 = vunpack.c.l.b16 %v457
    %v1317 = vunpack.c.l.b16 %v458
    %v1318 = vunpack.c.l.b16 %v459
    %v1319 = vunpack.c.l.b16 %v460
    %v1320 = vunpack.c.l.b16 %v461
    %v1321 = vunpack.c.l.b16 %v462
    %v1322 = vunpack.c.l.b16 %v463
    %v1323 = vunpack.c.l.b16 %v464
    %v1324 = vunpack.c.l.b16 %v465
    %v1325 = vunpack.c.l.b16 %v466
    %v1326 = vunpack.c.l.b16 %v467
    %v1327 = vunpack.c.l.b16 %v468
    %v1328 = vunpack.c.l.b16 %v469
    %v1329 = vunpack.c.l.b16 %v470
    %v1330 = vunpack.c.l.b16 %v471
    %v1331 = vunpack.c.l.b16 %v472
    %v1332 = vunpack.c.l.b16 %v473
    %v1333 = vunpack.c.l.b16 %v474
    %v1334 = vunpack.c.l.b16 %v475
    %v1335 = vunpack.c.l.b16 %v476
    %v1336 = vunpack.c.l.b16 %v477
    %v1337 = vunpack.c.l.b16 %v478
    %v1338 = vunpack.c.l.b16 %v479
    %v1339 = vunpack.c.l.b16 %v480
    %v1340 = vunpack.c.l.b16 %v481
    %v1341 = vunpack.c.l.b16 %v482
    %v1342 = vunpack.c.l.b16 %v483
    %v1343 = vunpack.c.l.b16 %v484
    %v1344 = vunpack.c.l.b16 %v485
    %v1345 = vunpack.c.l.b16 %v486
    %v1346 = vunpack.c.l.b16 %v487
    %v1347 = vunpack.c.l.b16 %v488
    %v1348 = vunpack.c.l.b16 %v489
    %v1349 = vunpack.c.l.b16 %v490
    %v1350 = vunpack.c.l.b16 %v491
    %v1351 = vunpack.c.l.b16 %v492
    %v1352 = vunpack.c.l.b16 %v493
    %v1353 = vunpack.c.l.b16 %v494
    %v1354 = vunpack.c.l.b16 %v495
    %v1355 = vpack.c.b16 %v972, %v971
    %v1356 = vpack.c.b16 %v974, %v973
    %v1357 = vpack.c.b16 %v976, %v975
    %v1358 = vpack.c.b16 %v978, %v977
    %v1359 = vpack.c.b16 %v980, %v979
    %v1360 = vpack.c.b16 %v982, %v981
    %v1361 = vpack.c.b16 %v984, %v983
    %v1362 = vpack.c.b16 %v986, %v985
    %v1363 = vpack.c.b16 %v988, %v987
    %v1364 = vpack.c.b16 %v990, %v989
    %v1365 = vpack.c.b16 %v992, %v991
    %v1366 = vpack.c.b16 %v994, %v993
    %v1367 = vpack.c.b16 %v996, %v995
    %v1368 = vpack.c.b16 %v998, %v997
    %v1369 = vpack.c.b16 %v1000, %v999
    %v1370 = vpack.c.b16 %v1002, %v1001
    %v1371 = vpack.c.b16 %v1004, %v1003
    %v1372 = vpack.c.b16 %v1006, %v1005
    %v1373 = vpack.c.b16 %v1008, %v1007
    %v1374 = vpack.c.b16 %v1010, %v1009
    %v1375 = vpack.c.b16 %v1012, %v1011
    %v1376 = vpack.c.b16 %v1014, %v1013
    %v1377 = vpack.c.b16 %v1016, %v1015
    %v1378 = vpack.c.b16 %v1018, %v1017
    %v1379 = vpack.c.b16 %v1020, %v1019
    %v1380 = vpack.c.b16 %v1022, %v1021
    %v1381 = vpack.c.b16 %v1024, %v1023
    %v1382 = vpack.c.b16 %v1026, %v1025
    %v1383 = vpack.c.b16 %v1028, %v1027
    %v1384 = vpack.c.b16 %v1030, %v1029
    %v1385 = vpack.c.b16 %v1032, %v1031
    %v1386 = vpack.c.b16 %v1034, %v1033
    %v1387 = vpack.c.b16 %v1036, %v1035
    %v1388 = vpack.c.b16 %v1038, %v1037
    %v1389 = vpack.c.b16 %v1040, %v1039
    %v1390 = vpack.c.b16 %v1042, %v1041
    %v1391 = vpack.c.b16 %v1044, %v1043
    %v1392 = vpack.c.b16 %v1046, %v1045
    %v1393 = vpack.c.b16 %v1048, %v1047
    %v1394 = vpack.c.b16 %v1050, %v1049
    %v1395 = vpack.c.b16 %v1052, %v1051
    %v1396 = vpack.c.b16 %v1054, %v1053
    %v1397 = vpack.c.b16 %v1056, %v1055
    %v1398 = vpack.c.b16 %v1058, %v1057
    %v1399 = vpack.c.b16 %v1060, %v1059
    %v1400 = vpack.c.b16 %v1062, %v1061
    %v1401 = vpack.c.b16 %v1064, %v1063
    %v1402 = vpack.c.b16 %v1066, %v1065
    %v1403 = vpack.c.b16 %v1068, %v1067
    %v1404 = vpack.c.b16 %v1070, %v1069
    %v1405 = vpack.c.b16 %v1072, %v1071
    %v1406 = vpack.c.b16 %v1074, %v1073
    %v1407 = vpack.c.b16 %v1076, %v1075
    %v1408 = vpack.c.b16 %v1078, %v1077
    %v1409 = vpack.c.b16 %v1080, %v1079
    %v1410 = vpack.c.b16 %v1082, %v1081
    %v1411 = vpack.c.b16 %v1084, %v1083
    %v1412 = vpack.c.b16 %v1086, %v1085
    %v1413 = vpack.c.b16 %v1088, %v1087
    %v1414 = vpack.c.b16 %v1090, %v1089
    %v1415 = vpack.c.b16 %v1092, %v1091
    %v1416 = vpack.c.b16 %v1094, %v1093
    %v1417 = vpack.c.b16 %v1096, %v1095
    %v1418 = vpack.c.b16 %v1098, %v1097
    %v1419 = vpack.c.b16 %v1100, %v1099
    %v1420 = vpack.c.b16 %v1102, %v1101
    %v1421 = vpack.c.b16 %v1104, %v1103
    %v1422 = vpack.c.b16 %v1106, %v1105
    %v1423 = vpack.c.b16 %v1108, %v1107
    %v1424 = vpack.c.b16 %v1110, %v1109
    %v1425 = vpack.c.b16 %v1112, %v1111
    %v1426 = vpack.c.b16 %v1114, %v1113
    %v1427 = vpack.c.b16 %v1116, %v1115
    %v1428 = vpack.c.b16 %v1118, %v1117
    %v1429 = vpack.c.b16 %v1120, %v1119
    %v1430 = vpack.c.b16 %v1122, %v1121
    %v1431 = vpack.c.b16 %v1124, %v1123
    %v1432 = vpack.c.b16 %v1126, %v1125
    %v1433 = vpack.c.b16 %v1128, %v1127
    %v1434 = vpack.c.b16 %v1130, %v1129
    %v1435 = vpack.c.b16 %v1132, %v1131
    %v1436 = vpack.c.b16 %v1134, %v1133
    %v1437 = vpack.c.b16 %v1136, %v1135
    %v1438 = vpack.c.b16 %v1138, %v1137
    %v1439 = vpack.c.b16 %v1140, %v1139
    %v1440 = vpack.c.b16 %v1142, %v1141
    %v1441 = vpack.c.b16 %v1144, %v1143
    %v1442 = vpack.c.b16 %v1146, %v1145
    %v1443 = vpack.c.b16 %v1148, %v1147
    %v1444 = vpack.c.b16 %v1150, %v1149
    %v1445 = vpack.c.b16 %v1152, %v1151
    %v1446 = vpack.c.b16 %v1154, %v1153
    %v1447 = vpack.c.b16 %v1156, %v1155
    %v1448 = vpack.c.b16 %v1158, %v1157
    %v1449 = vpack.c.b16 %v1160, %v1159
    %v1450 = vpack.c.b16 %v1162, %v1161
    %v1451 = vpack.c.b16 %v1164, %v1163
    %v1452 = vpack.c.b16 %v1166, %v1165
    %v1453 = vpack.c.b16 %v1168, %v1167
    %v1454 = vpack.c.b16 %v1170, %v1169
    %v1455 = vpack.c.b16 %v1172, %v1171
    %v1456 = vpack.c.b16 %v1174, %v1173
    %v1457 = vpack.c.b16 %v1176, %v1175
    %v1458 = vpack.c.b16 %v1178, %v1177
    %v1459 = vpack.c.b16 %v1180, %v1179
    %v1460 = vpack.c.b16 %v1182, %v1181
    %v1461 = vpack.c.b16 %v1184, %v1183
    %v1462 = vpack.c.b16 %v1186, %v1185
    %v1463 = vpack.c.b16 %v1188, %v1187
    %v1464 = vpack.c.b16 %v1190, %v1189
    %v1465 = vpack.c.b16 %v1192, %v1191
    %v1466 = vpack.c.b16 %v1194, %v1193
    %v1467 = vpack.c.b16 %v1196, %v1195
    %v1468 = vpack.c.b16 %v1198, %v1197
    %v1469 = vpack.c.b16 %v1200, %v1199
    %v1470 = vpack.c.b16 %v1202, %v1201
    %v1471 = vpack.c.b16 %v1204, %v1203
    %v1472 = vpack.c.b16 %v1206, %v1205
    %v1473 = vpack.c.b16 %v1208, %v1207
    %v1474 = vpack.c.b16 %v1210, %v1209
    %v1475 = vpack.c.b16 %v1212, %v1211
    %v1476 = vpack.c.b16 %v1214, %v1213
    %v1477 = vpack.c.b16 %v1216, %v1215
    %v1478 = vpack.c.b16 %v1218, %v1217
    %v1479 = vpack.c.b16 %v1220, %v1219
    %v1480 = vpack.c.b16 %v1222, %v1221
    %v1481 = vpack.c.b16 %v1224, %v1223
    %v1482 = vpack.c.b16 %v1226, %v1225
    %v1483 = vpack.c.b16 %v1228, %v1227
    %v1484 = vpack.c.b16 %v1230, %v1229
    %v1485 = vpack.c.b16 %v1232, %v1231
    %v1486 = vpack.c.b16 %v1234, %v1233
    %v1487 = vpack.c.b16 %v1236, %v1235
    %v1488 = vpack.c.b16 %v1238, %v1237
    %v1489 = vpack.c.b16 %v1240, %v1239
    %v1490 = vpack.c.b16 %v1242, %v1241
    %v1491 = vpack.c.b16 %v1244, %v1243
    %v1492 = vpack.c.b16 %v1246, %v1245
    %v1493 = vpack.c.b16 %v1248, %v1247
    %v1494 = vpack.c.b16 %v1250, %v1249
    %v1495 = vpack.c.b16 %v1252, %v1251
    %v1496 = vpack.c.b16 %v1254, %v1253
    %v1497 = vpack.c.b16 %v1256, %v1255
    %v1498 = vpack.c.b16 %v1258, %v1257
    %v1499 = vpack.c.b16 %v1260, %v1259
    %v1500 = vpack.c.b16 %v1262, %v1261
    %v1501 = vpack.c.b16 %v1264, %v1263
    %v1502 = vpack.c.b16 %v1266, %v1265
    %v1503 = vpack.c.b16 %v1268, %v1267
    %v1504 = vpack.c.b16 %v1270, %v1269
    %v1505 = vpack.c.b16 %v1272, %v1271
    %v1506 = vpack.c.b16 %v1274, %v1273
    %v1507 = vpack.c.b16 %v1276, %v1275
    %v1508 = vpack.c.b16 %v1278, %v1277
    %v1509 = vpack.c.b16 %v1280, %v1279
    %v1510 = vpack.c.b16 %v1282, %v1281
    %v1511 = vpack.c.b16 %v1284, %v1283
    %v1512 = vpack.c.b16 %v1286, %v1285
    %v1513 = vpack.c.b16 %v1288, %v1287
    %v1514 = vpack.c.b16 %v1290, %v1289
    %v1515 = vpack.c.b16 %v1292, %v1291
    %v1516 = vpack.c.b16 %v1294, %v1293
    %v1517 = vpack.c.b16 %v1296, %v1295
    %v1518 = vpack.c.b16 %v1298, %v1297
    %v1519 = vpack.c.b16 %v1300, %v1299
    %v1520 = vpack.c.b16 %v1302, %v1301
    %v1521 = vpack.c.b16 %v1304, %v1303
    %v1522 = vpack.c.b16 %v1306, %v1305
    %v1523 = vpack.c.b16 %v1308, %v1307
    %v1524 = vpack.c.b16 %v1310, %v1309
    %v1525 = vpack.c.b16 %v1312, %v1311
    %v1526 = vpack.c.b16 %v1314, %v1313
    %v1527 = vpack.c.b16 %v1316, %v1315
    %v1528 = vpack.c.b16 %v1318, %v1317
    %v1529 = vpack.c.b16 %v1320, %v1319
    %v1530 = vpack.c.b16 %v1322, %v1321
    %v1531 = vpack.c.b16 %v1324, %v1323
    %v1532 = vpack.c.b16 %v1326, %v1325
    %v1533 = vpack.c.b16 %v1328, %v1327
    %v1534 = vpack.c.b16 %v1330, %v1329
    %v1535 = vpack.c.b16 %v1332, %v1331
    %v1536 = vpack.c.b16 %v1334, %v1333
    %v1537 = vpack.c.b16 %v1336, %v1335
    %v1538 = vpack.c.b16 %v1338, %v1337
    %v1539 = vpack.c.b16 %v1340, %v1339
    %v1540 = vpack.c.b16 %v1342, %v1341
    %v1541 = vpack.c.b16 %v1344, %v1343
    %v1542 = vpack.c.b16 %v1346, %v1345
    %v1543 = vpack.c.b16 %v1348, %v1347
    %v1544 = vpack.c.b16 %v1350, %v1349
    %v1545 = vpack.c.b16 %v1352, %v1351
    %v1546 = vpack.c.b16 %v1354, %v1353
    %1739 = vmatprep.subr.bf16.mxu0 0
    %1740 = vmatpush1.bf16.msra.mxu0 %v1355
    %1741 = vmatprep.subr.bf16.mxu0 0
    %1742 = vmatpush1.bf16.msra.mxu0 %v1356
    %1743 = vmatprep.subr.bf16.mxu0 0
    %1744 = vmatpush1.bf16.msra.mxu0 %v1357
    %1745 = vmatprep.subr.bf16.mxu0 0
    %1746 = vmatpush1.bf16.msra.mxu0 %v1358
    %1747 = vmatprep.subr.bf16.mxu0 0
    %1748 = vmatpush1.bf16.msra.mxu0 %v1359
    %1749 = vmatprep.subr.bf16.mxu0 0
    %1750 = vmatpush1.bf16.msra.mxu0 %v1360
    %1751 = vmatprep.subr.bf16.mxu0 0
    %1752 = vmatpush1.bf16.msra.mxu0 %v1361
    %1753 = vmatprep.subr.bf16.mxu0 0
    %1754 = vmatpush1.bf16.msra.mxu0 %v1362
    %1755 = vmatprep.subr.bf16.mxu0 0
    %1756 = vmatpush1.bf16.msra.mxu0 %v1363
    %1757 = vmatprep.subr.bf16.mxu0 0
    %1758 = vmatpush1.bf16.msra.mxu0 %v1364
    %1759 = vmatprep.subr.bf16.mxu0 0
    %1760 = vmatpush1.bf16.msra.mxu0 %v1365
    %1761 = vmatprep.subr.bf16.mxu0 0
    %1762 = vmatpush1.bf16.msra.mxu0 %v1366
    %1763 = vmatprep.subr.bf16.mxu0 0
    %1764 = vmatpush1.bf16.msra.mxu0 %v1367
    %1765 = vmatprep.subr.bf16.mxu0 0
    %1766 = vmatpush1.bf16.msra.mxu0 %v1368
    %1767 = vmatprep.subr.bf16.mxu0 0
    %1768 = vmatpush1.bf16.msra.mxu0 %v1369
    %1769 = vmatprep.subr.bf16.mxu0 0
    %1770 = vmatpush1.bf16.msra.mxu0 %v1370
    %1771 = vmatprep.mubr.bf16.mxu0 %v540
    %1772 = vmatmul.mubr.bf16.gmra.mrb[0].mxu0 %v539
    %v1773 = vpop.f32.mrb[0].mxu0
    %v1774 = vadd.f32 %v501, %v1773
    %v1775 = vpop.f32.mrb[0].mxu0
    %v1776 = vpop.f32.mrb[0].mxu0
    %v1777 = vpop.f32.mrb[0].mxu0
    %1778 = vdwg.mxu0
    %1779 = vmatprep.subr.bf16.mxu0 0
    %1780 = vmatpush1.bf16.msra.mxu0 %v1371
    %1781 = vmatprep.subr.bf16.mxu0 0
    %1782 = vmatpush1.bf16.msra.mxu0 %v1372
    %1783 = vmatprep.subr.bf16.mxu0 0
    %1784 = vmatpush1.bf16.msra.mxu0 %v1373
    %1785 = vmatprep.subr.bf16.mxu0 0
    %1786 = vmatpush1.bf16.msra.mxu0 %v1374
    %1787 = vmatprep.subr.bf16.mxu0 0
    %1788 = vmatpush1.bf16.msra.mxu0 %v1375
    %1789 = vmatprep.subr.bf16.mxu0 0
    %1790 = vmatpush1.bf16.msra.mxu0 %v1376
    %1791 = vmatprep.subr.bf16.mxu0 0
    %1792 = vmatpush1.bf16.msra.mxu0 %v1377
    %1793 = vmatprep.subr.bf16.mxu0 0
    %1794 = vmatpush1.bf16.msra.mxu0 %v1378
    %1795 = vmatprep.subr.bf16.mxu0 0
    %1796 = vmatpush1.bf16.msra.mxu0 %v1379
    %1797 = vmatprep.subr.bf16.mxu0 0
    %1798 = vmatpush1.bf16.msra.mxu0 %v1380
    %1799 = vmatprep.subr.bf16.mxu0 0
    %1800 = vmatpush1.bf16.msra.mxu0 %v1381
    %1801 = vmatprep.subr.bf16.mxu0 0
    %1802 = vmatpush1.bf16.msra.mxu0 %v1382
    %1803 = vmatprep.subr.bf16.mxu0 0
    %1804 = vmatpush1.bf16.msra.mxu0 %v1383
    %1805 = vmatprep.subr.bf16.mxu0 0
    %1806 = vmatpush1.bf16.msra.mxu0 %v1384
    %1807 = vmatprep.subr.bf16.mxu0 0
    %1808 = vmatpush1.bf16.msra.mxu0 %v1385
    %1809 = vmatprep.subr.bf16.mxu0 0
    %1810 = vmatpush1.bf16.msra.mxu0 %v1386
    %1811 = vmatprep.mubr.bf16.mxu0 %v542
    %1812 = vmatmul.mubr.bf16.gmra.mrb[0].mxu0 %v541
    %v1813 = vpop.f32.mrb[0].mxu0
    %v1814 = vadd.f32 %v1774, %v1813
    %v1815 = vpop.f32.mrb[0].mxu0
    %v1816 = vpop.f32.mrb[0].mxu0
    %v1817 = vpop.f32.mrb[0].mxu0
    %1818 = vdwg.mxu0
    %1819 = vmatprep.subr.bf16.mxu0 0
    %1820 = vmatpush1.bf16.msra.mxu0 %v1387
    %1821 = vmatprep.subr.bf16.mxu0 0
    %1822 = vmatpush1.bf16.msra.mxu0 %v1388
    %1823 = vmatprep.subr.bf16.mxu0 0
    %1824 = vmatpush1.bf16.msra.mxu0 %v1389
    %1825 = vmatprep.subr.bf16.mxu0 0
    %1826 = vmatpush1.bf16.msra.mxu0 %v1390
    %1827 = vmatprep.subr.bf16.mxu0 0
    %1828 = vmatpush1.bf16.msra.mxu0 %v1391
    %1829 = vmatprep.subr.bf16.mxu0 0
    %1830 = vmatpush1.bf16.msra.mxu0 %v1392
    %1831 = vmatprep.subr.bf16.mxu0 0
    %1832 = vmatpush1.bf16.msra.mxu0 %v1393
    %1833 = vmatprep.subr.bf16.mxu0 0
    %1834 = vmatpush1.bf16.msra.mxu0 %v1394
    %1835 = vmatprep.subr.bf16.mxu0 0
    %1836 = vmatpush1.bf16.msra.mxu0 %v1395
    %1837 = vmatprep.subr.bf16.mxu0 0
    %1838 = vmatpush1.bf16.msra.mxu0 %v1396
    %1839 = vmatprep.subr.bf16.mxu0 0
    %1840 = vmatpush1.bf16.msra.mxu0 %v1397
    %1841 = vmatprep.subr.bf16.mxu0 0
    %1842 = vmatpush1.bf16.msra.mxu0 %v1398
    %1843 = vmatprep.subr.bf16.mxu0 0
    %1844 = vmatpush1.bf16.msra.mxu0 %v1399
    %1845 = vmatprep.subr.bf16.mxu0 0
    %1846 = vmatpush1.bf16.msra.mxu0 %v1400
    %1847 = vmatprep.subr.bf16.mxu0 0
    %1848 = vmatpush1.bf16.msra.mxu0 %v1401
    %1849 = vmatprep.subr.bf16.mxu0 0
    %1850 = vmatpush1.bf16.msra.mxu0 %v1402
    %1851 = vmatprep.mubr.bf16.mxu0 %v544
    %1852 = vmatmul.mubr.bf16.gmra.mrb[0].mxu0 %v543
    %v1853 = vpop.f32.mrb[0].mxu0
    %v1854 = vadd.f32 %v1814, %v1853
    %v1855 = vpop.f32.mrb[0].mxu0
    %v1856 = vpop.f32.mrb[0].mxu0
    %v1857 = vpop.f32.mrb[0].mxu0
    %1858 = vdwg.mxu0
    %1859 = vmatprep.subr.bf16.mxu0 0
    %1860 = vmatpush1.bf16.msra.mxu0 %v1403
    %1861 = vmatprep.subr.bf16.mxu0 0
    %1862 = vmatpush1.bf16.msra.mxu0 %v1404
    %1863 = vmatprep.subr.bf16.mxu0 0
    %1864 = vmatpush1.bf16.msra.mxu0 %v1405
    %1865 = vmatprep.subr.bf16.mxu0 0
    %1866 = vmatpush1.bf16.msra.mxu0 %v1406
    %1867 = vmatprep.subr.bf16.mxu0 0
    %1868 = vmatpush1.bf16.msra.mxu0 %v1407
    %1869 = vmatprep.subr.bf16.mxu0 0
    %1870 = vmatpush1.bf16.msra.mxu0 %v1408
    %1871 = vmatprep.subr.bf16.mxu0 0
    %1872 = vmatpush1.bf16.msra.mxu0 %v1409
    %1873 = vmatprep.subr.bf16.mxu0 0
    %1874 = vmatpush1.bf16.msra.mxu0 %v1410
    %1875 = vmatprep.subr.bf16.mxu0 0
    %1876 = vmatpush1.bf16.msra.mxu0 %v1411
    %1877 = vmatprep.subr.bf16.mxu0 0
    %1878 = vmatpush1.bf16.msra.mxu0 %v1412
    %1879 = vmatprep.subr.bf16.mxu0 0
    %1880 = vmatpush1.bf16.msra.mxu0 %v1413
    %1881 = vmatprep.subr.bf16.mxu0 0
    %1882 = vmatpush1.bf16.msra.mxu0 %v1414
    %1883 = vmatprep.subr.bf16.mxu0 0
    %1884 = vmatpush1.bf16.msra.mxu0 %v1415
    %1885 = vmatprep.subr.bf16.mxu0 0
    %1886 = vmatpush1.bf16.msra.mxu0 %v1416
    %1887 = vmatprep.subr.bf16.mxu0 0
    %1888 = vmatpush1.bf16.msra.mxu0 %v1417
    %1889 = vmatprep.subr.bf16.mxu0 0
    %1890 = vmatpush1.bf16.msra.mxu0 %v1418
    %1891 = vmatprep.mubr.bf16.mxu0 %v546
    %1892 = vmatmul.mubr.bf16.gmra.mrb[0].mxu0 %v545
    %v1893 = vpop.f32.mrb[0].mxu0
    %v1894 = vadd.f32 %v1854, %v1893
    %v1895 = vpop.f32.mrb[0].mxu0
    %v1896 = vpop.f32.mrb[0].mxu0
    %v1897 = vpop.f32.mrb[0].mxu0
    %1898 = vdwg.mxu0
    %1899 = vmatprep.subr.bf16.mxu0 0
    %1900 = vmatpush1.bf16.msra.mxu0 %v1419
    %1901 = vmatprep.subr.bf16.mxu0 0
    %1902 = vmatpush1.bf16.msra.mxu0 %v1420
    %1903 = vmatprep.subr.bf16.mxu0 0
    %1904 = vmatpush1.bf16.msra.mxu0 %v1421
    %1905 = vmatprep.subr.bf16.mxu0 0
    %1906 = vmatpush1.bf16.msra.mxu0 %v1422
    %1907 = vmatprep.subr.bf16.mxu0 0
    %1908 = vmatpush1.bf16.msra.mxu0 %v1423
    %1909 = vmatprep.subr.bf16.mxu0 0
    %1910 = vmatpush1.bf16.msra.mxu0 %v1424
    %1911 = vmatprep.subr.bf16.mxu0 0
    %1912 = vmatpush1.bf16.msra.mxu0 %v1425
    %1913 = vmatprep.subr.bf16.mxu0 0
    %1914 = vmatpush1.bf16.msra.mxu0 %v1426
    %1915 = vmatprep.subr.bf16.mxu0 0
    %1916 = vmatpush1.bf16.msra.mxu0 %v1427
    %1917 = vmatprep.subr.bf16.mxu0 0
    %1918 = vmatpush1.bf16.msra.mxu0 %v1428
    %1919 = vmatprep.subr.bf16.mxu0 0
    %1920 = vmatpush1.bf16.msra.mxu0 %v1429
    %1921 = vmatprep.subr.bf16.mxu0 0
    %1922 = vmatpush1.bf16.msra.mxu0 %v1430
    %1923 = vmatprep.subr.bf16.mxu0 0
    %1924 = vmatpush1.bf16.msra.mxu0 %v1431
    %1925 = vmatprep.subr.bf16.mxu0 0
    %1926 = vmatpush1.bf16.msra.mxu0 %v1432
    %1927 = vmatprep.subr.bf16.mxu0 0
    %1928 = vmatpush1.bf16.msra.mxu0 %v1433
    %1929 = vmatprep.subr.bf16.mxu0 0
    %1930 = vmatpush1.bf16.msra.mxu0 %v1434
    %1931 = vmatprep.mubr.bf16.mxu0 %v548
    %1932 = vmatmul.mubr.bf16.gmra.mrb[0].mxu0 %v547
    %v1933 = vpop.f32.mrb[0].mxu0
    %v1934 = vadd.f32 %v1894, %v1933
    %v1935 = vpop.f32.mrb[0].mxu0
    %v1936 = vpop.f32.mrb[0].mxu0
    %v1937 = vpop.f32.mrb[0].mxu0
    %1938 = vdwg.mxu0
    %1939 = vmatprep.subr.bf16.mxu0 0
    %1940 = vmatpush1.bf16.msra.mxu0 %v1435
    %1941 = vmatprep.subr.bf16.mxu0 0
    %1942 = vmatpush1.bf16.msra.mxu0 %v1436
    %1943 = vmatprep.subr.bf16.mxu0 0
    %1944 = vmatpush1.bf16.msra.mxu0 %v1437
    %1945 = vmatprep.subr.bf16.mxu0 0
    %1946 = vmatpush1.bf16.msra.mxu0 %v1438
    %1947 = vmatprep.subr.bf16.mxu0 0
    %1948 = vmatpush1.bf16.msra.mxu0 %v1439
    %1949 = vmatprep.subr.bf16.mxu0 0
    %1950 = vmatpush1.bf16.msra.mxu0 %v1440
    %1951 = vmatprep.subr.bf16.mxu0 0
    %1952 = vmatpush1.bf16.msra.mxu0 %v1441
    %1953 = vmatprep.subr.bf16.mxu0 0
    %1954 = vmatpush1.bf16.msra.mxu0 %v1442
    %1955 = vmatprep.subr.bf16.mxu0 0
    %1956 = vmatpush1.bf16.msra.mxu0 %v1443
    %1957 = vmatprep.subr.bf16.mxu0 0
    %1958 = vmatpush1.bf16.msra.mxu0 %v1444
    %1959 = vmatprep.subr.bf16.mxu0 0
    %1960 = vmatpush1.bf16.msra.mxu0 %v1445
    %1961 = vmatprep.subr.bf16.mxu0 0
    %1962 = vmatpush1.bf16.msra.mxu0 %v1446
    %1963 = vmatprep.subr.bf16.mxu0 0
    %1964 = vmatpush1.bf16.msra.mxu0 %v1447
    %1965 = vmatprep.subr.bf16.mxu0 0
    %1966 = vmatpush1.bf16.msra.mxu0 %v1448
    %1967 = vmatprep.subr.bf16.mxu0 0
    %1968 = vmatpush1.bf16.msra.mxu0 %v1449
    %1969 = vmatprep.subr.bf16.mxu0 0
    %1970 = vmatpush1.bf16.msra.mxu0 %v1450
    %1971 = vmatprep.mubr.bf16.mxu0 %v550
    %1972 = vmatmul.mubr.bf16.gmra.mrb[0].mxu0 %v549
    %v1973 = vpop.f32.mrb[0].mxu0
    %v1974 = vadd.f32 %v1934, %v1973
    %v1975 = vpop.f32.mrb[0].mxu0
    %v1976 = vpop.f32.mrb[0].mxu0
    %v1977 = vpop.f32.mrb[0].mxu0
    %1978 = vdwg.mxu0
    %1979 = vmatprep.subr.bf16.mxu0 0
    %1980 = vmatpush1.bf16.msra.mxu0 %v1451
    %1981 = vmatprep.subr.bf16.mxu0 0
    %1982 = vmatpush1.bf16.msra.mxu0 %v1452
    %1983 = vmatprep.subr.bf16.mxu0 0
    %1984 = vmatpush1.bf16.msra.mxu0 %v1453
    %1985 = vmatprep.subr.bf16.mxu0 0
    %1986 = vmatpush1.bf16.msra.mxu0 %v1454
    %1987 = vmatprep.subr.bf16.mxu0 0
    %1988 = vmatpush1.bf16.msra.mxu0 %v1455
    %1989 = vmatprep.subr.bf16.mxu0 0
    %1990 = vmatpush1.bf16.msra.mxu0 %v1456
    %1991 = vmatprep.subr.bf16.mxu0 0
    %1992 = vmatpush1.bf16.msra.mxu0 %v1457
    %1993 = vmatprep.subr.bf16.mxu0 0
    %1994 = vmatpush1.bf16.msra.mxu0 %v1458
    %1995 = vmatprep.subr.bf16.mxu0 0
    %1996 = vmatpush1.bf16.msra.mxu0 %v1459
    %1997 = vmatprep.subr.bf16.mxu0 0
    %1998 = vmatpush1.bf16.msra.mxu0 %v1460
    %1999 = vmatprep.subr.bf16.mxu0 0
    %2000 = vmatpush1.bf16.msra.mxu0 %v1461
    %2001 = vmatprep.subr.bf16.mxu0 0
    %2002 = vmatpush1.bf16.msra.mxu0 %v1462
    %2003 = vmatprep.subr.bf16.mxu0 0
    %2004 = vmatpush1.bf16.msra.mxu0 %v1463
    %2005 = vmatprep.subr.bf16.mxu0 0
    %2006 = vmatpush1.bf16.msra.mxu0 %v1464
    %2007 = vmatprep.subr.bf16.mxu0 0
    %2008 = vmatpush1.bf16.msra.mxu0 %v1465
    %2009 = vmatprep.subr.bf16.mxu0 0
    %2010 = vmatpush1.bf16.msra.mxu0 %v1466
    %2011 = vmatprep.mubr.bf16.mxu0 %v552
    %2012 = vmatmul.mubr.bf16.gmra.mrb[0].mxu0 %v551
    %v2013 = vpop.f32.mrb[0].mxu0
    %v2014 = vadd.f32 %v1974, %v2013
    %v2015 = vpop.f32.mrb[0].mxu0
    %v2016 = vpop.f32.mrb[0].mxu0
    %v2017 = vpop.f32.mrb[0].mxu0
    %2018 = vdwg.mxu0
    %2019 = vmatprep.subr.bf16.mxu0 0
    %2020 = vmatpush1.bf16.msra.mxu0 %v1467
    %2021 = vmatprep.subr.bf16.mxu0 0
    %2022 = vmatpush1.bf16.msra.mxu0 %v1468
    %2023 = vmatprep.subr.bf16.mxu0 0
    %2024 = vmatpush1.bf16.msra.mxu0 %v1469
    %2025 = vmatprep.subr.bf16.mxu0 0
    %2026 = vmatpush1.bf16.msra.mxu0 %v1470
    %2027 = vmatprep.subr.bf16.mxu0 0
    %2028 = vmatpush1.bf16.msra.mxu0 %v1471
    %2029 = vmatprep.subr.bf16.mxu0 0
    %2030 = vmatpush1.bf16.msra.mxu0 %v1472
    %2031 = vmatprep.subr.bf16.mxu0 0
    %2032 = vmatpush1.bf16.msra.mxu0 %v1473
    %2033 = vmatprep.subr.bf16.mxu0 0
    %2034 = vmatpush1.bf16.msra.mxu0 %v1474
    %2035 = vmatprep.subr.bf16.mxu0 0
    %2036 = vmatpush1.bf16.msra.mxu0 %v1475
    %2037 = vmatprep.subr.bf16.mxu0 0
    %2038 = vmatpush1.bf16.msra.mxu0 %v1476
    %2039 = vmatprep.subr.bf16.mxu0 0
    %2040 = vmatpush1.bf16.msra.mxu0 %v1477
    %2041 = vmatprep.subr.bf16.mxu0 0
    %2042 = vmatpush1.bf16.msra.mxu0 %v1478
    %2043 = vmatprep.subr.bf16.mxu0 0
    %2044 = vmatpush1.bf16.msra.mxu0 %v1479
    %2045 = vmatprep.subr.bf16.mxu0 0
    %2046 = vmatpush1.bf16.msra.mxu0 %v1480
    %2047 = vmatprep.subr.bf16.mxu0 0
    %2048 = vmatpush1.bf16.msra.mxu0 %v1481
    %2049 = vmatprep.subr.bf16.mxu0 0
    %2050 = vmatpush1.bf16.msra.mxu0 %v1482
    %2051 = vmatprep.mubr.bf16.mxu0 %v554
    %2052 = vmatmul.mubr.bf16.gmra.mrb[0].mxu0 %v553
    %v2053 = vpop.f32.mrb[0].mxu0
    %v2054 = vadd.f32 %v2014, %v2053
    %v2055 = vpop.f32.mrb[0].mxu0
    %v2056 = vpop.f32.mrb[0].mxu0
    %v2057 = vpop.f32.mrb[0].mxu0
    %2058 = vdwg.mxu0
    %2059 = vmatprep.subr.bf16.mxu0 0
    %2060 = vmatpush1.bf16.msra.mxu0 %v1483
    %2061 = vmatprep.subr.bf16.mxu0 0
    %2062 = vmatpush1.bf16.msra.mxu0 %v1484
    %2063 = vmatprep.subr.bf16.mxu0 0
    %2064 = vmatpush1.bf16.msra.mxu0 %v1485
    %2065 = vmatprep.subr.bf16.mxu0 0
    %2066 = vmatpush1.bf16.msra.mxu0 %v1486
    %2067 = vmatprep.subr.bf16.mxu0 0
    %2068 = vmatpush1.bf16.msra.mxu0 %v1487
    %2069 = vmatprep.subr.bf16.mxu0 0
    %2070 = vmatpush1.bf16.msra.mxu0 %v1488
    %2071 = vmatprep.subr.bf16.mxu0 0
    %2072 = vmatpush1.bf16.msra.mxu0 %v1489
    %2073 = vmatprep.subr.bf16.mxu0 0
    %2074 = vmatpush1.bf16.msra.mxu0 %v1490
    %2075 = vmatprep.subr.bf16.mxu0 0
    %2076 = vmatpush1.bf16.msra.mxu0 %v1491
    %2077 = vmatprep.subr.bf16.mxu0 0
    %2078 = vmatpush1.bf16.msra.mxu0 %v1492
    %2079 = vmatprep.subr.bf16.mxu0 0
    %2080 = vmatpush1.bf16.msra.mxu0 %v1493
    %2081 = vmatprep.subr.bf16.mxu0 0
    %2082 = vmatpush1.bf16.msra.mxu0 %v1494
    %2083 = vmatprep.subr.bf16.mxu0 0
    %2084 = vmatpush1.bf16.msra.mxu0 %v1495
    %2085 = vmatprep.subr.bf16.mxu0 0
    %2086 = vmatpush1.bf16.msra.mxu0 %v1496
    %2087 = vmatprep.subr.bf16.mxu0 0
    %2088 = vmatpush1.bf16.msra.mxu0 %v1497
    %2089 = vmatprep.subr.bf16.mxu0 0
    %2090 = vmatpush1.bf16.msra.mxu0 %v1498
    %2091 = vmatprep.mubr.bf16.mxu0 %v556
    %2092 = vmatmul.mubr.bf16.gmra.mrb[0].mxu0 %v555
    %v2093 = vpop.f32.mrb[0].mxu0
    %v2094 = vadd.f32 %v2054, %v2093
    %v2095 = vpop.f32.mrb[0].mxu0
    %v2096 = vpop.f32.mrb[0].mxu0
    %v2097 = vpop.f32.mrb[0].mxu0
    %2098 = vdwg.mxu0
    %2099 = vmatprep.subr.bf16.mxu0 0
    %2100 = vmatpush1.bf16.msra.mxu0 %v1499
    %2101 = vmatprep.subr.bf16.mxu0 0
    %2102 = vmatpush1.bf16.msra.mxu0 %v1500
    %2103 = vmatprep.subr.bf16.mxu0 0
    %2104 = vmatpush1.bf16.msra.mxu0 %v1501
    %2105 = vmatprep.subr.bf16.mxu0 0
    %2106 = vmatpush1.bf16.msra.mxu0 %v1502
    %2107 = vmatprep.subr.bf16.mxu0 0
    %2108 = vmatpush1.bf16.msra.mxu0 %v1503
    %2109 = vmatprep.subr.bf16.mxu0 0
    %2110 = vmatpush1.bf16.msra.mxu0 %v1504
    %2111 = vmatprep.subr.bf16.mxu0 0
    %2112 = vmatpush1.bf16.msra.mxu0 %v1505
    %2113 = vmatprep.subr.bf16.mxu0 0
    %2114 = vmatpush1.bf16.msra.mxu0 %v1506
    %2115 = vmatprep.subr.bf16.mxu0 0
    %2116 = vmatpush1.bf16.msra.mxu0 %v1507
    %2117 = vmatprep.subr.bf16.mxu0 0
    %2118 = vmatpush1.bf16.msra.mxu0 %v1508
    %2119 = vmatprep.subr.bf16.mxu0 0
    %2120 = vmatpush1.bf16.msra.mxu0 %v1509
    %2121 = vmatprep.subr.bf16.mxu0 0
    %2122 = vmatpush1.bf16.msra.mxu0 %v1510
    %2123 = vmatprep.subr.bf16.mxu0 0
    %2124 = vmatpush1.bf16.msra.mxu0 %v1511
    %2125 = vmatprep.subr.bf16.mxu0 0
    %2126 = vmatpush1.bf16.msra.mxu0 %v1512
    %2127 = vmatprep.subr.bf16.mxu0 0
    %2128 = vmatpush1.bf16.msra.mxu0 %v1513
    %2129 = vmatprep.subr.bf16.mxu0 0
    %2130 = vmatpush1.bf16.msra.mxu0 %v1514
    %2131 = vmatprep.mubr.bf16.mxu0 %v558
    %2132 = vmatmul.mubr.bf16.gmra.mrb[0].mxu0 %v557
    %v2133 = vpop.f32.mrb[0].mxu0
    %v2134 = vadd.f32 %v2094, %v2133
    %v2135 = vpop.f32.mrb[0].mxu0
    %v2136 = vpop.f32.mrb[0].mxu0
    %v2137 = vpop.f32.mrb[0].mxu0
    %2138 = vdwg.mxu0
    %2139 = vmatprep.subr.bf16.mxu0 0
    %2140 = vmatpush1.bf16.msra.mxu0 %v1515
    %2141 = vmatprep.subr.bf16.mxu0 0
    %2142 = vmatpush1.bf16.msra.mxu0 %v1516
    %2143 = vmatprep.subr.bf16.mxu0 0
    %2144 = vmatpush1.bf16.msra.mxu0 %v1517
    %2145 = vmatprep.subr.bf16.mxu0 0
    %2146 = vmatpush1.bf16.msra.mxu0 %v1518
    %2147 = vmatprep.subr.bf16.mxu0 0
    %2148 = vmatpush1.bf16.msra.mxu0 %v1519
    %2149 = vmatprep.subr.bf16.mxu0 0
    %2150 = vmatpush1.bf16.msra.mxu0 %v1520
    %2151 = vmatprep.subr.bf16.mxu0 0
    %2152 = vmatpush1.bf16.msra.mxu0 %v1521
    %2153 = vmatprep.subr.bf16.mxu0 0
    %2154 = vmatpush1.bf16.msra.mxu0 %v1522
    %2155 = vmatprep.subr.bf16.mxu0 0
    %2156 = vmatpush1.bf16.msra.mxu0 %v1523
    %2157 = vmatprep.subr.bf16.mxu0 0
    %2158 = vmatpush1.bf16.msra.mxu0 %v1524
    %2159 = vmatprep.subr.bf16.mxu0 0
    %2160 = vmatpush1.bf16.msra.mxu0 %v1525
    %2161 = vmatprep.subr.bf16.mxu0 0
    %2162 = vmatpush1.bf16.msra.mxu0 %v1526
    %2163 = vmatprep.subr.bf16.mxu0 0
    %2164 = vmatpush1.bf16.msra.mxu0 %v1527
    %2165 = vmatprep.subr.bf16.mxu0 0
    %2166 = vmatpush1.bf16.msra.mxu0 %v1528
    %2167 = vmatprep.subr.bf16.mxu0 0
    %2168 = vmatpush1.bf16.msra.mxu0 %v1529
    %2169 = vmatprep.subr.bf16.mxu0 0
    %2170 = vmatpush1.bf16.msra.mxu0 %v1530
    %2171 = vmatprep.mubr.bf16.mxu0 %v560
    %2172 = vmatmul.mubr.bf16.gmra.mrb[0].mxu0 %v559
    %v2173 = vpop.f32.mrb[0].mxu0
    %v2174 = vadd.f32 %v2134, %v2173
    %v2175 = vpop.f32.mrb[0].mxu0
    %v2176 = vpop.f32.mrb[0].mxu0
    %v2177 = vpop.f32.mrb[0].mxu0
    %2178 = vdwg.mxu0
    %2179 = vmatprep.subr.bf16.mxu0 0
    %2180 = vmatpush1.bf16.msra.mxu0 %v1531
    %2181 = vmatprep.subr.bf16.mxu0 0
    %2182 = vmatpush1.bf16.msra.mxu0 %v1532
    %2183 = vmatprep.subr.bf16.mxu0 0
    %2184 = vmatpush1.bf16.msra.mxu0 %v1533
    %2185 = vmatprep.subr.bf16.mxu0 0
    %2186 = vmatpush1.bf16.msra.mxu0 %v1534
    %2187 = vmatprep.subr.bf16.mxu0 0
    %2188 = vmatpush1.bf16.msra.mxu0 %v1535
    %2189 = vmatprep.subr.bf16.mxu0 0
    %2190 = vmatpush1.bf16.msra.mxu0 %v1536
    %2191 = vmatprep.subr.bf16.mxu0 0
    %2192 = vmatpush1.bf16.msra.mxu0 %v1537
    %2193 = vmatprep.subr.bf16.mxu0 0
    %2194 = vmatpush1.bf16.msra.mxu0 %v1538
    %2195 = vmatprep.subr.bf16.mxu0 0
    %2196 = vmatpush1.bf16.msra.mxu0 %v1539
    %2197 = vmatprep.subr.bf16.mxu0 0
    %2198 = vmatpush1.bf16.msra.mxu0 %v1540
    %2199 = vmatprep.subr.bf16.mxu0 0
    %2200 = vmatpush1.bf16.msra.mxu0 %v1541
    %2201 = vmatprep.subr.bf16.mxu0 0
    %2202 = vmatpush1.bf16.msra.mxu0 %v1542
    %2203 = vmatprep.subr.bf16.mxu0 0
    %2204 = vmatpush1.bf16.msra.mxu0 %v1543
    %2205 = vmatprep.subr.bf16.mxu0 0
    %2206 = vmatpush1.bf16.msra.mxu0 %v1544
    %2207 = vmatprep.subr.bf16.mxu0 0
    %2208 = vmatpush1.bf16.msra.mxu0 %v1545
    %2209 = vmatprep.subr.bf16.mxu0 0
    %2210 = vmatpush1.bf16.msra.mxu0 %v1546
    %2211 = vmatprep.mubr.bf16.mxu0 %v562
    %2212 = vmatmul.mubr.bf16.gmra.mrb[0].mxu0 %v561
    %v2213 = vpop.f32.mrb[0].mxu0
    %v2214 = vadd.f32 %v2174, %v2213
    %v2215 = vpop.f32.mrb[0].mxu0
    %v2216 = vpop.f32.mrb[0].mxu0
    %v2217 = vpop.f32.mrb[0].mxu0
    %2218 = vdwg.mxu0
    %v2219 = vxor.u32 %v2214, 2147483648
    %v2220 = vmul.f32 %v2219, 1.442695
    %v2221 = vpow.pop %v2220
    %v2222 = vadd.f32 %v2221, 1.0
    %v2223 = vrcp.pop %v2222
    %v2224 = vmul.f32 1.0, %v2223
    %v2225 = vpack.c.bf16 %v2224, %v2224
    %v2226 = vld [vmem:[#allocation7] sm:$0xf]
    %v2227 = vld [vmem:[#allocation7 + $0x4] sm:$0xf]
    %v2228 = vld [vmem:[#allocation7 + $0x8] sm:$0xf]
    %v2229 = vld [vmem:[#allocation7 + $0xc] sm:$0xf]
    %v2230 = vld [vmem:[#allocation7 + $0x10] sm:$0xf]
    %v2231 = vld [vmem:[#allocation7 + $0x14] sm:$0xf]
    %v2232 = vld [vmem:[#allocation7 + $0x18] sm:$0xf]
    %v2233 = vld [vmem:[#allocation7 + $0x1c] sm:$0xf]
    %v2234 = vld [vmem:[#allocation7 + $0x20] sm:$0xf]
    %v2235 = vld [vmem:[#allocation7 + $0x24] sm:$0xf]
    %v2236 = vld [vmem:[#allocation7 + $0x28] sm:$0xf]
    %v2237 = vld [vmem:[#allocation7 + $0x2c] sm:$0xf]
    %v2238 = vld [vmem:[#allocation7 + $0x30] sm:$0xf]
    %v2239 = vld [vmem:[#allocation7 + $0x34] sm:$0xf]
    %v2240 = vld [vmem:[#allocation7 + $0x38] sm:$0xf]
    %v2241 = vld [vmem:[#allocation7 + $0x3c] sm:$0xf]
    %v2242 = vld [vmem:[%s4] sm:$0x1]
    %v2244 = vlaneseq
    %v2245 = vshrl.u32 %v2244, 7
    %v2246 = vsub.s32 0, %v2245
    %v2247 = vrot.slane %v2242, %v2246
    %v2265 = vunpack.c.l.b16 %v2226
    %v2266 = vunpack.c.l.b16 %v2227
    %v2267 = vunpack.c.l.b16 %v2228
    %v2268 = vunpack.c.l.b16 %v2229
    %v2269 = vunpack.c.l.b16 %v2230
    %v2270 = vunpack.c.l.b16 %v2231
    %v2271 = vunpack.c.l.b16 %v2232
    %v2272 = vunpack.c.l.b16 %v2233
    %v2273 = vunpack.c.l.b16 %v2234
    %v2274 = vunpack.c.l.b16 %v2235
    %v2275 = vunpack.c.l.b16 %v2236
    %v2276 = vunpack.c.l.b16 %v2237
    %v2277 = vunpack.c.l.b16 %v2238
    %v2278 = vunpack.c.l.b16 %v2239
    %v2279 = vunpack.c.l.b16 %v2240
    %v2280 = vunpack.c.l.b16 %v2241
    %v2281 = vpack.c.b16 %v2266, %v2265
    %v2282 = vpack.c.b16 %v2268, %v2267
    %v2283 = vpack.c.b16 %v2270, %v2269
    %v2284 = vpack.c.b16 %v2272, %v2271
    %v2285 = vpack.c.b16 %v2274, %v2273
    %v2286 = vpack.c.b16 %v2276, %v2275
    %v2287 = vpack.c.b16 %v2278, %v2277
    %v2288 = vpack.c.b16 %v2280, %v2279
    %2297 = vmatprep.subr.bf16.mxu0 0
    %2298 = vmatpush1.bf16.msra.mxu0 %v2281
    %2299 = vmatprep.subr.bf16.mxu0 0
    %2300 = vmatpush1.bf16.msra.mxu0 %v2282
    %2301 = vmatprep.subr.bf16.mxu0 0
    %2302 = vmatpush1.bf16.msra.mxu0 %v2283
    %2303 = vmatprep.subr.bf16.mxu0 0
    %2304 = vmatpush1.bf16.msra.mxu0 %v2284
    %2305 = vmatprep.subr.bf16.mxu0 0
    %2306 = vmatpush1.bf16.msra.mxu0 %v2285
    %2307 = vmatprep.subr.bf16.mxu0 0
    %2308 = vmatpush1.bf16.msra.mxu0 %v2286
    %2309 = vmatprep.subr.bf16.mxu0 0
    %2310 = vmatpush1.bf16.msra.mxu0 %v2287
    %2311 = vmatprep.subr.bf16.mxu0 0
    %2312 = vmatpush1.bf16.msra.mxu0 %v2288
    %2313 = vmatprep.subr.bf16.mxu0 0
    %2314 = vmatpush1.bf16.msra.mxu0 0
    %2315 = vmatprep.subr.bf16.mxu0 0
    %2316 = vmatpush1.bf16.msra.mxu0 0
    %2317 = vmatprep.subr.bf16.mxu0 0
    %2318 = vmatpush1.bf16.msra.mxu0 0
    %2319 = vmatprep.subr.bf16.mxu0 0
    %2320 = vmatpush1.bf16.msra.mxu0 0
    %2321 = vmatprep.subr.bf16.mxu0 0
    %2322 = vmatpush1.bf16.msra.mxu0 0
    %2323 = vmatprep.subr.bf16.mxu0 0
    %2324 = vmatpush1.bf16.msra.mxu0 0
    %2325 = vmatprep.subr.bf16.mxu0 0
    %2326 = vmatpush1.bf16.msra.mxu0 0
    %2327 = vmatprep.subr.bf16.mxu0 0
    %2328 = vmatpush1.bf16.msra.mxu0 0
    %2329 = vmatprep.mubr.bf16.mxu0 0
    %2330 = vmatmul.mubr.bf16.gmra.mrb[0].mxu0 %v2225
    %v2331 = vpop.f32.mrb[0].mxu0
    %v2332 = vadd.f32 %v2247, %v2331
    %v2333 = vpop.f32.mrb[0].mxu0
    %v2334 = vpop.f32.mrb[0].mxu0
    %v2335 = vpop.f32.mrb[0].mxu0
    %2336 = vdwg.mxu0
    %v2337 = vxor.u32 %v2332, 2147483648
    %v2338 = vmul.f32 %v2337, 1.442695
    %v2339 = vpow.pop %v2338
    %v2340 = vadd.f32 %v2339, 1.0
    %v2341 = vrcp.pop %v2340
    %v2342 = vmul.f32 1.0, %v2341
    %v2343 = vpack.c.bf16 %v2342, %v2342
    %v2344 = vld [vmem:[#allocation8] sm:$0xf]
    %v2345 = vld [vmem:[#allocation8 + $0x4] sm:$0xf]
    %v2346 = vld [vmem:[#allocation8 + $0x8] sm:$0xf]
    %v2347 = vld [vmem:[#allocation8 + $0xc] sm:$0xf]
    %v2348 = vld [vmem:[#allocation8 + $0x10] sm:$0xf]
    %v2349 = vld [vmem:[#allocation8 + $0x14] sm:$0xf]
    %v2350 = vld [vmem:[#allocation8 + $0x18] sm:$0xf]
    %v2351 = vld [vmem:[#allocation8 + $0x1c] sm:$0xf]
    %v2352 = vld [vmem:[#allocation8 + $0x20] sm:$0xf]
    %v2353 = vld [vmem:[#allocation8 + $0x24] sm:$0xf]
    %v2354 = vld [vmem:[#allocation8 + $0x28] sm:$0xf]
    %v2355 = vld [vmem:[#allocation8 + $0x2c] sm:$0xf]
    %v2356 = vld [vmem:[#allocation8 + $0x30] sm:$0xf]
    %v2357 = vld [vmem:[#allocation8 + $0x34] sm:$0xf]
    %v2358 = vld [vmem:[#allocation8 + $0x38] sm:$0xf]
    %v2359 = vld [vmem:[#allocation8 + $0x3c] sm:$0xf]
    %v2360 = vld [vmem:[%s6] sm:$0x1]
    %v2362 = vlaneseq
    %v2363 = vshrl.u32 %v2362, 7
    %v2364 = vsub.s32 0, %v2363
    %v2365 = vrot.slane %v2360, %v2364
    %v2383 = vunpack.c.l.b16 %v2344
    %v2384 = vunpack.c.l.b16 %v2345
    %v2385 = vunpack.c.l.b16 %v2346
    %v2386 = vunpack.c.l.b16 %v2347
    %v2387 = vunpack.c.l.b16 %v2348
    %v2388 = vunpack.c.l.b16 %v2349
    %v2389 = vunpack.c.l.b16 %v2350
    %v2390 = vunpack.c.l.b16 %v2351
    %v2391 = vunpack.c.l.b16 %v2352
    %v2392 = vunpack.c.l.b16 %v2353
    %v2393 = vunpack.c.l.b16 %v2354
    %v2394 = vunpack.c.l.b16 %v2355
    %v2395 = vunpack.c.l.b16 %v2356
    %v2396 = vunpack.c.l.b16 %v2357
    %v2397 = vunpack.c.l.b16 %v2358
    %v2398 = vunpack.c.l.b16 %v2359
    %v2399 = vpack.c.b16 %v2384, %v2383
    %v2400 = vpack.c.b16 %v2386, %v2385
    %v2401 = vpack.c.b16 %v2388, %v2387
    %v2402 = vpack.c.b16 %v2390, %v2389
    %v2403 = vpack.c.b16 %v2392, %v2391
    %v2404 = vpack.c.b16 %v2394, %v2393
    %v2405 = vpack.c.b16 %v2396, %v2395
    %v2406 = vpack.c.b16 %v2398, %v2397
    %2415 = vmatprep.subr.bf16.mxu0 0
    %2416 = vmatpush1.bf16.msra.mxu0 %v2399
    %2417 = vmatprep.subr.bf16.mxu0 0
    %2418 = vmatpush1.bf16.msra.mxu0 %v2400
    %2419 = vmatprep.subr.bf16.mxu0 0
    %2420 = vmatpush1.bf16.msra.mxu0 %v2401
    %2421 = vmatprep.subr.bf16.mxu0 0
    %2422 = vmatpush1.bf16.msra.mxu0 %v2402
    %2423 = vmatprep.subr.bf16.mxu0 0
    %2424 = vmatpush1.bf16.msra.mxu0 %v2403
    %2425 = vmatprep.subr.bf16.mxu0 0
    %2426 = vmatpush1.bf16.msra.mxu0 %v2404
    %2427 = vmatprep.subr.bf16.mxu0 0
    %2428 = vmatpush1.bf16.msra.mxu0 %v2405
    %2429 = vmatprep.subr.bf16.mxu0 0
    %2430 = vmatpush1.bf16.msra.mxu0 %v2406
    %2431 = vmatprep.subr.bf16.mxu0 0
    %2432 = vmatpush1.bf16.msra.mxu0 0
    %2433 = vmatprep.subr.bf16.mxu0 0
    %2434 = vmatpush1.bf16.msra.mxu0 0
    %2435 = vmatprep.subr.bf16.mxu0 0
    %2436 = vmatpush1.bf16.msra.mxu0 0
    %2437 = vmatprep.subr.bf16.mxu0 0
    %2438 = vmatpush1.bf16.msra.mxu0 0
    %2439 = vmatprep.subr.bf16.mxu0 0
    %2440 = vmatpush1.bf16.msra.mxu0 0
    %2441 = vmatprep.subr.bf16.mxu0 0
    %2442 = vmatpush1.bf16.msra.mxu0 0
    %2443 = vmatprep.subr.bf16.mxu0 0
    %2444 = vmatpush1.bf16.msra.mxu0 0
    %2445 = vmatprep.subr.bf16.mxu0 0
    %2446 = vmatpush1.bf16.msra.mxu0 0
    %2447 = vmatprep.mubr.bf16.mxu0 0
    %2448 = vmatmul.mubr.bf16.gmra.mrb[0].mxu0 %v2343
    %v2449 = vpop.f32.mrb[0].mxu0
    %v2450 = vadd.f32 %v2365, %v2449
    %v2451 = vpop.f32.mrb[0].mxu0
    %v2452 = vpop.f32.mrb[0].mxu0
    %v2453 = vpop.f32.mrb[0].mxu0
    %2454 = vdwg.mxu0
    %v2455 = vxor.u32 %v2450, 2147483648
    %v2456 = vmul.f32 %v2455, 1.442695
    %v2457 = vpow.pop %v2456
    %v2458 = vadd.f32 %v2457, 1.0
    %v2459 = vrcp.pop %v2458
    %v2460 = vmul.f32 1.0, %v2459
    %v2461 = vpack.c.bf16 %v2460, %v2460
    %v2462 = vld [vmem:[#allocation10] sm:$0xf]
    %v2463 = vld [vmem:[#allocation10 + $0x4] sm:$0xf]
    %v2464 = vld [vmem:[#allocation10 + $0x8] sm:$0xf]
    %v2465 = vld [vmem:[#allocation10 + $0xc] sm:$0xf]
    %v2466 = vld [vmem:[#allocation10 + $0x10] sm:$0xf]
    %v2467 = vld [vmem:[#allocation10 + $0x14] sm:$0xf]
    %v2468 = vld [vmem:[#allocation10 + $0x18] sm:$0xf]
    %v2469 = vld [vmem:[#allocation10 + $0x1c] sm:$0xf]
    %v2470 = vld [vmem:[#allocation10 + $0x20] sm:$0xf]
    %v2471 = vld [vmem:[#allocation10 + $0x24] sm:$0xf]
    %v2472 = vld [vmem:[#allocation10 + $0x28] sm:$0xf]
    %v2473 = vld [vmem:[#allocation10 + $0x2c] sm:$0xf]
    %v2474 = vld [vmem:[#allocation10 + $0x30] sm:$0xf]
    %v2475 = vld [vmem:[#allocation10 + $0x34] sm:$0xf]
    %v2476 = vld [vmem:[#allocation10 + $0x38] sm:$0xf]
    %v2477 = vld [vmem:[#allocation10 + $0x3c] sm:$0xf]
    %v2478 = vld [vmem:[%s8] sm:$0x1]
    %v2480 = vlaneseq
    %v2481 = vshrl.u32 %v2480, 7
    %v2482 = vsub.s32 0, %v2481
    %v2483 = vrot.slane %v2478, %v2482
    %v2501 = vunpack.c.l.b16 %v2462
    %v2502 = vunpack.c.l.b16 %v2463
    %v2503 = vunpack.c.l.b16 %v2464
    %v2504 = vunpack.c.l.b16 %v2465
    %v2505 = vunpack.c.l.b16 %v2466
    %v2506 = vunpack.c.l.b16 %v2467
    %v2507 = vunpack.c.l.b16 %v2468
    %v2508 = vunpack.c.l.b16 %v2469
    %v2509 = vunpack.c.l.b16 %v2470
    %v2510 = vunpack.c.l.b16 %v2471
    %v2511 = vunpack.c.l.b16 %v2472
    %v2512 = vunpack.c.l.b16 %v2473
    %v2513 = vunpack.c.l.b16 %v2474
    %v2514 = vunpack.c.l.b16 %v2475
    %v2515 = vunpack.c.l.b16 %v2476
    %v2516 = vunpack.c.l.b16 %v2477
    %v2517 = vpack.c.b16 %v2502, %v2501
    %v2518 = vpack.c.b16 %v2504, %v2503
    %v2519 = vpack.c.b16 %v2506, %v2505
    %v2520 = vpack.c.b16 %v2508, %v2507
    %v2521 = vpack.c.b16 %v2510, %v2509
    %v2522 = vpack.c.b16 %v2512, %v2511
    %v2523 = vpack.c.b16 %v2514, %v2513
    %v2524 = vpack.c.b16 %v2516, %v2515
    %2533 = vmatprep.subr.bf16.mxu0 0
    %2534 = vmatpush1.bf16.msra.mxu0 %v2517
    %2535 = vmatprep.subr.bf16.mxu0 0
    %2536 = vmatpush1.bf16.msra.mxu0 %v2518
    %2537 = vmatprep.subr.bf16.mxu0 0
    %2538 = vmatpush1.bf16.msra.mxu0 %v2519
    %2539 = vmatprep.subr.bf16.mxu0 0
    %2540 = vmatpush1.bf16.msra.mxu0 %v2520
    %2541 = vmatprep.subr.bf16.mxu0 0
    %2542 = vmatpush1.bf16.msra.mxu0 %v2521
    %2543 = vmatprep.subr.bf16.mxu0 0
    %2544 = vmatpush1.bf16.msra.mxu0 %v2522
    %2545 = vmatprep.subr.bf16.mxu0 0
    %2546 = vmatpush1.bf16.msra.mxu0 %v2523
    %2547 = vmatprep.subr.bf16.mxu0 0
    %2548 = vmatpush1.bf16.msra.mxu0 %v2524
    %2549 = vmatprep.subr.bf16.mxu0 0
    %2550 = vmatpush1.bf16.msra.mxu0 0
    %2551 = vmatprep.subr.bf16.mxu0 0
    %2552 = vmatpush1.bf16.msra.mxu0 0
    %2553 = vmatprep.subr.bf16.mxu0 0
    %2554 = vmatpush1.bf16.msra.mxu0 0
    %2555 = vmatprep.subr.bf16.mxu0 0
    %2556 = vmatpush1.bf16.msra.mxu0 0
    %2557 = vmatprep.subr.bf16.mxu0 0
    %2558 = vmatpush1.bf16.msra.mxu0 0
    %2559 = vmatprep.subr.bf16.mxu0 0
    %2560 = vmatpush1.bf16.msra.mxu0 0
    %2561 = vmatprep.subr.bf16.mxu0 0
    %2562 = vmatpush1.bf16.msra.mxu0 0
    %2563 = vmatprep.subr.bf16.mxu0 0
    %2564 = vmatpush1.bf16.msra.mxu0 0
    %2565 = vmatprep.mubr.bf16.mxu0 0
    %2566 = vmatmul.mubr.bf16.gmra.mrb[0].mxu0 %v2461
    %v2567 = vpop.f32.mrb[0].mxu0
    %v2568 = vadd.f32 %v2483, %v2567
    %v2569 = vpop.f32.mrb[0].mxu0
    %v2570 = vpop.f32.mrb[0].mxu0
    %v2571 = vpop.f32.mrb[0].mxu0
    %2572 = vdwg.mxu0
    %2573 = vst [vmem:[#allocation11] sm:$0xff] %v2568
    // Predicated region
    $region58: #{tpu_custom_call.1} parent=1 // pred_check
      _
    $region59: #{tpu_custom_call.1} parent=1 // pred_check_branch
      %2575 = sbr.rel (0) target = $region61
    $region60: #{tpu_custom_call.1} parent=1 // pred_region
      %s2577 = ssub.s32 128, 128
      %2578 = vsyncadd [#allocation4], %s2577
      %s2580 = sshll.u32 [#allocation11], 4
      %s2581 = int_to_ptr.vmem [resolvable:$true] %s2580
      %2583 = dma.vmem_to_hbm [thread:$0]  %s2581, 128, %s9, [#allocation4]
    $region61: #{tpu_custom_call.1} parent=1 // pred_fallthru
      _
    // Predicated region
    $region62: #{tpu_custom_call.1} parent=1 // pred_check
      _
    $region63: #{tpu_custom_call.1} parent=1 // pred_check_branch
      %2585 = sbr.rel (0) target = $region65
    $region64: #{tpu_custom_call.1} parent=1 // pred_region
      %2586 = dma.done [#allocation4], 128
    $region65: #{tpu_custom_call.1} parent=1 // pred_fallthru
      _
    %2587 = vsyncpa [#allocation3], 1
    %2588 = vsyncpa [#allocation6], 1
    %2589 = vsyncpa [#allocation9], 1
    %2590 = vsyncpa [#allocation4], 1

</llo_original>
